<compile_context>
chip_gen: v7x
topology: tpu7x:2x2x1
jax: 0.10.0
libtpu: 0.0.40
codegen_flags: <defaults>
</compile_context>

<pallas_src>
import math
import numpy as np
import jax
import jax.numpy as jnp
from jax.experimental import pallas as pl
from jax.experimental.pallas import tpu as pltpu

EPS = 1e-5
NEG_SLOPE = 0.2


def _pick_batch_block(N, H, WC, target_rows=512, vmem_budget=40 * 1024 * 1024):
    """Samples per grid step: grow M = B*H toward a tall MXU pass.

    The ">= 2 grid steps" constraint (keep both v7x TensorCores busy) is only
    honoured when it still yields M >= 128 rows; on 1-TC parts a 1-step grid
    costs nothing and a taller matmul always wins.
    """
    def fits(d):
        blk = d * H * WC * 4                          # one f32 (B,H,WC) block
        pads = d * ((H + 4) + (H + 2)) * WC * 2       # bf16 pad scratches
        return 4 * blk + pads <= vmem_budget          # 2x dbl-buffered in+out

    cands = [d for d in range(1, N + 1)
             if N % d == 0 and d * H <= target_rows and fits(d)]
    if not cands:
        return 1
    multi = [d for d in cands if (N // d) >= 2 and d * H >= 128]
    return max(multi) if multi else max(cands)


def _combined_conv_weight(w, W, C, dilation):
    """(Cout, Cin, 3, 3) torch conv weight -> (3, W*C, W*C) bf16.

    For each ky tap, the (W*C, W*C) block maps an (un-padded) input row to the
    output row; the three kx taps and their horizontal zero padding are folded
    in via clipped shifted (W, W) identities (kron with the channel matrix).
    """
    blocks = []
    for ky in range(3):
        A = jnp.zeros((W * C, W * C), jnp.float32)
        for kx in range(3):
            shift = (kx - 1) * dilation
            # P[w_in, w_out] = 1  iff  w_out = w_in - shift  (clipped at edges)
            P = jnp.eye(W, k=-shift, dtype=jnp.float32)
            A = A + jnp.kron(P, w[:, :, ky, kx].T.astype(jnp.float32))
        blocks.append(A)
    return jnp.stack(blocks, axis=0).astype(jnp.bfloat16)


@jax.jit
def feed_forward_pallas(x, w1, b1, w2, b2):
    """x: (N, C, H, W) float32 (NCHW, PyTorch convention)."""
    N, C, H, W = x.shape
    WC = W * C
    HW = H * W
    B = _pick_batch_block(N, H, WC)
    grid = (N // B,)
    inv_hw = 1.0 / float(HW)

    # ---- wrapper glue: channel-minor layout (transpose only, no padding) ----
    x_flat = jnp.transpose(x, (0, 2, 3, 1)).reshape(N, H, WC).astype(jnp.float32)
    # TODO(synk): the NCHW->NHWC transpose (and its inverse at the end) stays in
    # XLA; fusing it in-kernel needs a C-minor transpose that lowers poorly at C=4.

    w1c = _combined_conv_weight(w1, W, C, dilation=2)          # (3, WC, WC) bf16
    w2c = _combined_conv_weight(w2, W, C, dilation=1)          # (3, WC, WC) bf16
    b1_row = jnp.tile(b1.astype(jnp.float32), (W,))[None, :]   # (1, WC)
    b2_row = jnp.tile(b2.astype(jnp.float32), (W,))[None, :]   # (1, WC)

    # block-diagonal channel selectors for the fused instance-norm matmuls
    sel = jnp.tile(jnp.eye(C, dtype=jnp.float32), (W, 1))      # (WC, C)
    zs = jnp.zeros_like(sel)
    sel2 = jnp.concatenate(
        [jnp.concatenate([sel, zs], axis=1),
         jnp.concatenate([zs, sel], axis=1)], axis=0)          # (2*WC, 2*C)
    selt = sel.T
    zt = jnp.zeros_like(selt)
    selt2 = jnp.concatenate(
        [jnp.concatenate([selt, zt], axis=1),
         jnp.concatenate([zt, selt], axis=1)], axis=0)         # (2*C, 2*WC)

    # ------------------------------- kernel ---------------------------------
    def kernel(x_ref, w1_ref, b1_ref, w2_ref, b2_ref, sel2_ref, selt2_ref,
               out_ref, pad1_ref, pad2_ref):
        f32 = jnp.float32
        bf16 = jnp.bfloat16

        def norm_lrelu(acc):                       # acc: (B*H, WC) f32
            y3 = acc.reshape(B, H, WC)
            s1 = jnp.sum(y3, axis=1)               # (B, WC)  per-sample row sums
            s2 = jnp.sum(y3 * y3, axis=1)          # (B, WC)
            st = jnp.concatenate([s1, s2], axis=-1)                   # (B, 2*WC)
            ch = jnp.dot(st, sel2_ref[...], preferred_element_type=f32)  # (B, 2*C)
            mean = ch[:, :C] * inv_hw
            var = ch[:, C:] * inv_hw - mean * mean
            inv = jax.lax.rsqrt(var + EPS)
            mi = jnp.concatenate([mean, inv], axis=-1)                # (B, 2*C)
            mf = jnp.dot(mi, selt2_ref[...], preferred_element_type=f32)  # (B, 2*WC)
            y = (y3 - mf[:, :WC][:, None, :]) * mf[:, WC:][:, None, :]
            return jnp.where(y >= 0.0, y, NEG_SLOPE * y)              # (B, H, WC)

        # ---- conv1 (dil=2, pad=2): stage padded input in bf16 ----
        # Border rows are rewritten every step: the scratch is per-core on
        # megacore, so a one-time program_id==0 init would be unsafe.
        pad1_ref[:, 0:2, :] = jnp.zeros((B, 2, WC), bf16)
        pad1_ref[:, H + 2:H + 4, :] = jnp.zeros((B, 2, WC), bf16)
        pad1_ref[:, 2:H + 2, :] = x_ref[...].astype(bf16)

        acc1 = jnp.zeros((B * H, WC), f32)
        for ky in range(3):                        # 3 accumulating MXU dots
            lhs = pad1_ref[:, 2 * ky:2 * ky + H, :].reshape(B * H, WC)
            acc1 = acc1 + jnp.dot(lhs, w1_ref[ky], preferred_element_type=f32)
        y1 = norm_lrelu(acc1 + b1_ref[...])        # (B, H, WC) f32

        # ---- conv2 (dil=1, pad=1): stage padded intermediate in bf16 ----
        pad2_ref[:, 0:1, :] = jnp.zeros((B, 1, WC), bf16)
        pad2_ref[:, H + 1:H + 2, :] = jnp.zeros((B, 1, WC), bf16)
        pad2_ref[:, 1:H + 1, :] = y1.astype(bf16)

        acc2 = jnp.zeros((B * H, WC), f32)
        for ky in range(3):
            lhs = pad2_ref[:, ky:ky + H, :].reshape(B * H, WC)
            acc2 = acc2 + jnp.dot(lhs, w2_ref[ky], preferred_element_type=f32)
        y2 = norm_lrelu(acc2 + b2_ref[...])        # (B, H, WC)

        # ---- residual add (re-read the f32 input block) + store ----
        out_ref[...] = x_ref[...] + y2

    # VMEM accounting: double-buffered f32 in/out blocks + bf16 pad scratches
    # + replicated weights/selectors, with headroom; capped below v7x's 64 MiB.
    blk = B * H * WC * 4
    pads = B * ((H + 4) + (H + 2)) * WC * 2
    const = 2 * 3 * WC * WC * 2 + 2 * WC * 4 + 2 * (2 * WC * 2 * C) * 4
    need = 4 * blk + pads + 2 * const
    vmem_limit = int(min(48 * 1024 * 1024, max(32 * 1024 * 1024, 2 * need)))

    out = pl.pallas_call(
        kernel,
        out_shape=jax.ShapeDtypeStruct((N, H, WC), jnp.float32),
        grid_spec=pltpu.PrefetchScalarGridSpec(
            num_scalar_prefetch=0,
            grid=grid,
            in_specs=[
                pl.BlockSpec((B, H, WC), lambda n: (n, 0, 0)),
                pl.BlockSpec((3, WC, WC), lambda n: (0, 0, 0)),
                pl.BlockSpec((1, WC), lambda n: (0, 0)),
                pl.BlockSpec((3, WC, WC), lambda n: (0, 0, 0)),
                pl.BlockSpec((1, WC), lambda n: (0, 0)),
                pl.BlockSpec((2 * WC, 2 * C), lambda n: (0, 0)),
                pl.BlockSpec((2 * C, 2 * WC), lambda n: (0, 0)),
            ],
            out_specs=pl.BlockSpec((B, H, WC), lambda n: (n, 0, 0)),
            scratch_shapes=[
                pltpu.VMEM((B, H + 4, WC), jnp.bfloat16),   # conv1 padded input
                pltpu.VMEM((B, H + 2, WC), jnp.bfloat16),   # conv2 padded input
            ],
        ),
        compiler_params=pltpu.CompilerParams(
            dimension_semantics=("parallel",),
            vmem_limit_bytes=vmem_limit,
        ),
    )(x_flat, w1c, b1_row, w2c, b2_row, sel2, selt2)

    return out.reshape(N, H, W, C).transpose(0, 3, 1, 2).astype(x.dtype)


# ----------------------------- numpy reference ------------------------------
def ref_forward(x, w1, b1, w2, b2):
    x = np.asarray(x, np.float64)
    w1, b1, w2, b2 = (np.asarray(a, np.float64) for a in (w1, b1, w2, b2))

    def conv(xx, w, b, dil, pad):
        N, Ci, H, W = xx.shape
        xp = np.pad(xx, ((0, 0), (0, 0), (pad, pad), (pad, pad)))
        out = np.zeros((N, w.shape[0], H, W))
        for ky in range(3):
            for kx in range(3):
                out += np.einsum(
                    'nihw,oi->nohw',
                    xp[:, :, ky * dil: ky * dil + H, kx * dil: kx * dil + W],
                    w[:, :, ky, kx])
        return out + b[None, :, None, None]

    def inorm(y):
        m = y.mean(axis=(2, 3), keepdims=True)
        v = y.var(axis=(2, 3), keepdims=True)
        return (y - m) / np.sqrt(v + 1e-5)

    def lrelu(y):
        return np.where(y >= 0, y, 0.2 * y)

    h = lrelu(inorm(conv(x, w1, b1, 2, 2)))
    h = lrelu(inorm(conv(h, w2, b2, 1, 1)))
    return x + h


if __name__ == "__main__":
    N, C, H, W = 2, 4, 16, 16          # num_hidden = 4
    key = jax.random.PRNGKey(0)
    k1, k2, k3, k4, k5 = jax.random.split(key, 5)
    bound = 1.0 / math.sqrt(C * 9)     # kaiming-uniform-ish, deterministic
    w1 = jax.random.uniform(k1, (C, C, 3, 3), jnp.float32, -bound, bound)
    b1 = jax.random.uniform(k2, (C,), jnp.float32, -bound, bound)
    w2 = jax.random.uniform(k3, (C, C, 3, 3), jnp.float32, -bound, bound)
    b2 = jax.random.uniform(k4, (C,), jnp.float32, -bound, bound)
    x = jax.random.normal(k5, (N, C, H, W), jnp.float32)

    out = feed_forward_pallas(x, w1, b1, w2, b2)
    out = jax.block_until_ready(out)

    ref = ref_forward(x, w1, b1, w2, b2)
    assert out.shape == (N, C, H, W)
    np.testing.assert_allclose(np.asarray(out), ref, rtol=3e-2, atol=3e-2)

    print("KERNEL_OK")
</pallas_src>

<mosaic_0001>
module attributes {stable_mosaic.version = 11 : i64} {
  func.func @kernel(%arg0: i32, %arg1: memref<2x16x64xf32, #tpu.memory_space<vmem>>, %arg2: memref<3x64x64xbf16, #tpu.memory_space<vmem>>, %arg3: memref<1x64xf32, #tpu.memory_space<vmem>>, %arg4: memref<3x64x64xbf16, #tpu.memory_space<vmem>>, %arg5: memref<1x64xf32, #tpu.memory_space<vmem>>, %arg6: memref<128x8xf32, #tpu.memory_space<vmem>>, %arg7: memref<8x128xf32, #tpu.memory_space<vmem>>, %arg8: memref<2x16x64xf32, #tpu.memory_space<vmem>>, %arg9: memref<2x20x64xbf16, #tpu.memory_space<vmem>>, %arg10: memref<2x18x64xbf16, #tpu.memory_space<vmem>>) attributes {dimension_semantics = [#tpu.dimension_semantics<parallel>], iteration_bounds = array<i64: 1>, scalar_prefetch = 0 : i64, scratch_operands = 2 : i64, tpu.core_type = #tpu.core_type<tc>, window_params = [{transform_indices = @transform_0, window_bounds = array<i64: 2, 16, 64>}, {pipeline_mode = #tpu.pipeline_mode<synchronous>, transform_indices = @transform_1, window_bounds = array<i64: 3, 64, 64>}, {pipeline_mode = #tpu.pipeline_mode<synchronous>, transform_indices = @transform_2, window_bounds = array<i64: 1, 64>}, {pipeline_mode = #tpu.pipeline_mode<synchronous>, transform_indices = @transform_3, window_bounds = array<i64: 3, 64, 64>}, {pipeline_mode = #tpu.pipeline_mode<synchronous>, transform_indices = @transform_4, window_bounds = array<i64: 1, 64>}, {pipeline_mode = #tpu.pipeline_mode<synchronous>, transform_indices = @transform_5, window_bounds = array<i64: 128, 8>}, {pipeline_mode = #tpu.pipeline_mode<synchronous>, transform_indices = @transform_6, window_bounds = array<i64: 8, 128>}, {transform_indices = @transform_7, window_bounds = array<i64: 2, 16, 64>}]} {
    %cst = arith.constant 0.000000e+00 : bf16
    %0 = vector.broadcast %cst : bf16 to vector<2x2x64xbf16>
    %c0 = arith.constant 0 : index
    %c0_0 = arith.constant 0 : index
    %c0_1 = arith.constant 0 : index
    %1 = vector.load %arg9[%c0, %c0_0, %c0_1] : memref<2x20x64xbf16, #tpu.memory_space<vmem>>, vector<2x2x64xbf16>
    tpu.vector_store %arg9[%c0, %c0_0, %c0_1], %0 {strides = array<i32>} : memref<2x20x64xbf16, #tpu.memory_space<vmem>>, vector<2x2x64xbf16>,
    %cst_2 = arith.constant 0.000000e+00 : bf16
    %2 = vector.broadcast %cst_2 : bf16 to vector<2x2x64xbf16>
    %c0_3 = arith.constant 0 : index
    %c18 = arith.constant 18 : index
    %c0_4 = arith.constant 0 : index
    %3 = vector.load %arg9[%c0_3, %c18, %c0_4] : memref<2x20x64xbf16, #tpu.memory_space<vmem>>, vector<2x2x64xbf16>
    tpu.vector_store %arg9[%c0_3, %c18, %c0_4], %2 {strides = array<i32>} : memref<2x20x64xbf16, #tpu.memory_space<vmem>>, vector<2x2x64xbf16>,
    %c0_5 = arith.constant 0 : index
    %c0_6 = arith.constant 0 : index
    %c0_7 = arith.constant 0 : index
    %4 = vector.load %arg1[%c0_5, %c0_6, %c0_7] : memref<2x16x64xf32, #tpu.memory_space<vmem>>, vector<2x16x64xf32>
    %5 = arith.truncf %4 : vector<2x16x64xf32> to vector<2x16x64xbf16>
    %c0_8 = arith.constant 0 : index
    %c2 = arith.constant 2 : index
    %c0_9 = arith.constant 0 : index
    %6 = vector.load %arg9[%c0_8, %c2, %c0_9] : memref<2x20x64xbf16, #tpu.memory_space<vmem>>, vector<2x16x64xbf16>
    tpu.vector_store %arg9[%c0_8, %c2, %c0_9], %5 {strides = array<i32>} : memref<2x20x64xbf16, #tpu.memory_space<vmem>>, vector<2x16x64xbf16>,
    %cst_10 = arith.constant 0.000000e+00 : f32
    %7 = vector.broadcast %cst_10 : f32 to vector<32x64xf32>
    %c0_11 = arith.constant 0 : index
    %c0_12 = arith.constant 0 : index
    %c0_13 = arith.constant 0 : index
    %8 = vector.load %arg9[%c0_11, %c0_12, %c0_13] : memref<2x20x64xbf16, #tpu.memory_space<vmem>>, vector<2x16x64xbf16>
    %9 = vector.shape_cast %8 : vector<2x16x64xbf16> to vector<32x64xbf16>
    %c0_14 = arith.constant 0 : index
    %c0_15 = arith.constant 0 : index
    %c0_16 = arith.constant 0 : index
    %10 = vector.load %arg2[%c0_14, %c0_15, %c0_16] : memref<3x64x64xbf16, #tpu.memory_space<vmem>>, vector<1x64x64xbf16>
    %11 = vector.shape_cast %10 : vector<1x64x64xbf16> to vector<64x64xbf16>
    %cst_17 = arith.constant dense<0.000000e+00> : vector<32x64xf32>
    %12 = tpu.matmul %9, %11, %cst_17 {dimension_numbers = #tpu.dot_dimension_numbers<[1], [0], [0], [1], [0, 0, 1, 1], [], []>} : vector<32x64xbf16>, vector<64x64xbf16>, vector<32x64xf32> -> vector<32x64xf32>
    %13 = arith.addf %7, %12 : vector<32x64xf32>
    %c0_18 = arith.constant 0 : index
    %c2_19 = arith.constant 2 : index
    %c0_20 = arith.constant 0 : index
    %14 = vector.load %arg9[%c0_18, %c2_19, %c0_20] : memref<2x20x64xbf16, #tpu.memory_space<vmem>>, vector<2x16x64xbf16>
    %15 = vector.shape_cast %14 : vector<2x16x64xbf16> to vector<32x64xbf16>
    %c1 = arith.constant 1 : index
    %c0_21 = arith.constant 0 : index
    %c0_22 = arith.constant 0 : index
    %16 = vector.load %arg2[%c1, %c0_21, %c0_22] : memref<3x64x64xbf16, #tpu.memory_space<vmem>>, vector<1x64x64xbf16>
    %17 = vector.shape_cast %16 : vector<1x64x64xbf16> to vector<64x64xbf16>
    %cst_23 = arith.constant dense<0.000000e+00> : vector<32x64xf32>
    %18 = tpu.matmul %15, %17, %cst_23 {dimension_numbers = #tpu.dot_dimension_numbers<[1], [0], [0], [1], [0, 0, 1, 1], [], []>} : vector<32x64xbf16>, vector<64x64xbf16>, vector<32x64xf32> -> vector<32x64xf32>
    %19 = arith.addf %13, %18 : vector<32x64xf32>
    %c0_24 = arith.constant 0 : index
    %c4 = arith.constant 4 : index
    %c0_25 = arith.constant 0 : index
    %20 = vector.load %arg9[%c0_24, %c4, %c0_25] : memref<2x20x64xbf16, #tpu.memory_space<vmem>>, vector<2x16x64xbf16>
    %21 = vector.shape_cast %20 : vector<2x16x64xbf16> to vector<32x64xbf16>
    %c2_26 = arith.constant 2 : index
    %c0_27 = arith.constant 0 : index
    %c0_28 = arith.constant 0 : index
    %22 = vector.load %arg2[%c2_26, %c0_27, %c0_28] : memref<3x64x64xbf16, #tpu.memory_space<vmem>>, vector<1x64x64xbf16>
    %23 = vector.shape_cast %22 : vector<1x64x64xbf16> to vector<64x64xbf16>
    %cst_29 = arith.constant dense<0.000000e+00> : vector<32x64xf32>
    %24 = tpu.matmul %21, %23, %cst_29 {dimension_numbers = #tpu.dot_dimension_numbers<[1], [0], [0], [1], [0, 0, 1, 1], [], []>} : vector<32x64xbf16>, vector<64x64xbf16>, vector<32x64xf32> -> vector<32x64xf32>
    %25 = arith.addf %19, %24 : vector<32x64xf32>
    %c0_30 = arith.constant 0 : index
    %c0_31 = arith.constant 0 : index
    %26 = vector.load %arg3[%c0_30, %c0_31] : memref<1x64xf32, #tpu.memory_space<vmem>>, vector<1x64xf32>
    %27 = vector.broadcast %26 : vector<1x64xf32> to vector<32x64xf32>
    %28 = arith.addf %25, %27 : vector<32x64xf32>
    %29 = vector.shape_cast %28 : vector<32x64xf32> to vector<2x16x64xf32>
    %cst_32 = arith.constant dense<0.000000e+00> : vector<2x64xf32>
    %30 = vector.multi_reduction <add>, %29, %cst_32 [1] : vector<2x16x64xf32> to vector<2x64xf32>
    %31 = arith.mulf %29, %29 : vector<2x16x64xf32>
    %cst_33 = arith.constant dense<0.000000e+00> : vector<2x64xf32>
    %32 = vector.multi_reduction <add>, %31, %cst_33 [1] : vector<2x16x64xf32> to vector<2x64xf32>
    %33 = tpu.concatenate %30, %32 in 1 : vector<2x64xf32>, vector<2x64xf32> -> vector<2x128xf32>
    %c0_34 = arith.constant 0 : index
    %c0_35 = arith.constant 0 : index
    %34 = vector.load %arg6[%c0_34, %c0_35] : memref<128x8xf32, #tpu.memory_space<vmem>>, vector<128x8xf32>
    %cst_36 = arith.constant dense<0.000000e+00> : vector<2x8xf32>
    %35 = tpu.matmul %33, %34, %cst_36 {dimension_numbers = #tpu.dot_dimension_numbers<[1], [0], [0], [1], [0, 0, 1, 1], [], []>} : vector<2x128xf32>, vector<128x8xf32>, vector<2x8xf32> -> vector<2x8xf32>
    %36 = vector.extract_strided_slice %35 {offsets = [0, 0], sizes = [2, 4], strides = [1, 1]} : vector<2x8xf32> to vector<2x4xf32>
    %cst_37 = arith.constant 3.906250e-03 : f32
    %37 = vector.broadcast %cst_37 : f32 to vector<2x4xf32>
    %38 = arith.mulf %36, %37 : vector<2x4xf32>
    %39 = vector.extract_strided_slice %35 {offsets = [0, 4], sizes = [2, 4], strides = [1, 1]} : vector<2x8xf32> to vector<2x4xf32>
    %cst_38 = arith.constant 3.906250e-03 : f32
    %40 = vector.broadcast %cst_38 : f32 to vector<2x4xf32>
    %41 = arith.mulf %39, %40 : vector<2x4xf32>
    %42 = arith.mulf %38, %38 : vector<2x4xf32>
    %43 = arith.subf %41, %42 : vector<2x4xf32>
    %cst_39 = arith.constant 9.99999974E-6 : f32
    %44 = vector.broadcast %cst_39 : f32 to vector<2x4xf32>
    %45 = arith.addf %43, %44 : vector<2x4xf32>
    %46 = math.rsqrt %45 : vector<2x4xf32>
    %47 = tpu.concatenate %38, %46 in 1 : vector<2x4xf32>, vector<2x4xf32> -> vector<2x8xf32>
    %c0_40 = arith.constant 0 : index
    %c0_41 = arith.constant 0 : index
    %48 = vector.load %arg7[%c0_40, %c0_41] : memref<8x128xf32, #tpu.memory_space<vmem>>, vector<8x128xf32>
    %cst_42 = arith.constant dense<0.000000e+00> : vector<2x128xf32>
    %49 = tpu.matmul %47, %48, %cst_42 {dimension_numbers = #tpu.dot_dimension_numbers<[1], [0], [0], [1], [0, 0, 1, 1], [], []>} : vector<2x8xf32>, vector<8x128xf32>, vector<2x128xf32> -> vector<2x128xf32>
    %50 = vector.extract_strided_slice %49 {offsets = [0, 0], sizes = [2, 64], strides = [1, 1]} : vector<2x128xf32> to vector<2x64xf32>
    %51 = vector.shape_cast %50 : vector<2x64xf32> to vector<2x1x64xf32>
    %52 = vector.broadcast %51 : vector<2x1x64xf32> to vector<2x16x64xf32>
    %53 = arith.subf %29, %52 : vector<2x16x64xf32>
    %54 = vector.extract_strided_slice %49 {offsets = [0, 64], sizes = [2, 64], strides = [1, 1]} : vector<2x128xf32> to vector<2x64xf32>
    %55 = vector.shape_cast %54 : vector<2x64xf32> to vector<2x1x64xf32>
    %56 = vector.broadcast %55 : vector<2x1x64xf32> to vector<2x16x64xf32>
    %57 = arith.mulf %53, %56 : vector<2x16x64xf32>
    %cst_43 = arith.constant 0.000000e+00 : f32
    %58 = vector.broadcast %cst_43 : f32 to vector<2x16x64xf32>
    %59 = arith.cmpf oge, %57, %58 : vector<2x16x64xf32>
    %cst_44 = arith.constant 2.000000e-01 : f32
    %60 = vector.broadcast %cst_44 : f32 to vector<2x16x64xf32>
    %61 = arith.mulf %60, %57 : vector<2x16x64xf32>
    %62 = arith.select %59, %57, %61 : vector<2x16x64xi1>, vector<2x16x64xf32>
    %cst_45 = arith.constant 0.000000e+00 : bf16
    %63 = vector.broadcast %cst_45 : bf16 to vector<2x1x64xbf16>
    %c0_46 = arith.constant 0 : index
    %c0_47 = arith.constant 0 : index
    %c0_48 = arith.constant 0 : index
    %64 = vector.load %arg10[%c0_46, %c0_47, %c0_48] : memref<2x18x64xbf16, #tpu.memory_space<vmem>>, vector<2x1x64xbf16>
    tpu.vector_store %arg10[%c0_46, %c0_47, %c0_48], %63 {strides = array<i32>} : memref<2x18x64xbf16, #tpu.memory_space<vmem>>, vector<2x1x64xbf16>,
    %cst_49 = arith.constant 0.000000e+00 : bf16
    %65 = vector.broadcast %cst_49 : bf16 to vector<2x1x64xbf16>
    %c0_50 = arith.constant 0 : index
    %c17 = arith.constant 17 : index
    %c0_51 = arith.constant 0 : index
    %66 = vector.load %arg10[%c0_50, %c17, %c0_51] : memref<2x18x64xbf16, #tpu.memory_space<vmem>>, vector<2x1x64xbf16>
    tpu.vector_store %arg10[%c0_50, %c17, %c0_51], %65 {strides = array<i32>} : memref<2x18x64xbf16, #tpu.memory_space<vmem>>, vector<2x1x64xbf16>,
    %67 = arith.truncf %62 : vector<2x16x64xf32> to vector<2x16x64xbf16>
    %c0_52 = arith.constant 0 : index
    %c1_53 = arith.constant 1 : index
    %c0_54 = arith.constant 0 : index
    %68 = vector.load %arg10[%c0_52, %c1_53, %c0_54] : memref<2x18x64xbf16, #tpu.memory_space<vmem>>, vector<2x16x64xbf16>
    tpu.vector_store %arg10[%c0_52, %c1_53, %c0_54], %67 {strides = array<i32>} : memref<2x18x64xbf16, #tpu.memory_space<vmem>>, vector<2x16x64xbf16>,
    %cst_55 = arith.constant 0.000000e+00 : f32
    %69 = vector.broadcast %cst_55 : f32 to vector<32x64xf32>
    %c0_56 = arith.constant 0 : index
    %c0_57 = arith.constant 0 : index
    %c0_58 = arith.constant 0 : index
    %70 = vector.load %arg10[%c0_56, %c0_57, %c0_58] : memref<2x18x64xbf16, #tpu.memory_space<vmem>>, vector<2x16x64xbf16>
    %71 = vector.shape_cast %70 : vector<2x16x64xbf16> to vector<32x64xbf16>
    %c0_59 = arith.constant 0 : index
    %c0_60 = arith.constant 0 : index
    %c0_61 = arith.constant 0 : index
    %72 = vector.load %arg4[%c0_59, %c0_60, %c0_61] : memref<3x64x64xbf16, #tpu.memory_space<vmem>>, vector<1x64x64xbf16>
    %73 = vector.shape_cast %72 : vector<1x64x64xbf16> to vector<64x64xbf16>
    %cst_62 = arith.constant dense<0.000000e+00> : vector<32x64xf32>
    %74 = tpu.matmul %71, %73, %cst_62 {dimension_numbers = #tpu.dot_dimension_numbers<[1], [0], [0], [1], [0, 0, 1, 1], [], []>} : vector<32x64xbf16>, vector<64x64xbf16>, vector<32x64xf32> -> vector<32x64xf32>
    %75 = arith.addf %69, %74 : vector<32x64xf32>
    %c0_63 = arith.constant 0 : index
    %c1_64 = arith.constant 1 : index
    %c0_65 = arith.constant 0 : index
    %76 = vector.load %arg10[%c0_63, %c1_64, %c0_65] : memref<2x18x64xbf16, #tpu.memory_space<vmem>>, vector<2x16x64xbf16>
    %77 = vector.shape_cast %76 : vector<2x16x64xbf16> to vector<32x64xbf16>
    %c1_66 = arith.constant 1 : index
    %c0_67 = arith.constant 0 : index
    %c0_68 = arith.constant 0 : index
    %78 = vector.load %arg4[%c1_66, %c0_67, %c0_68] : memref<3x64x64xbf16, #tpu.memory_space<vmem>>, vector<1x64x64xbf16>
    %79 = vector.shape_cast %78 : vector<1x64x64xbf16> to vector<64x64xbf16>
    %cst_69 = arith.constant dense<0.000000e+00> : vector<32x64xf32>
    %80 = tpu.matmul %77, %79, %cst_69 {dimension_numbers = #tpu.dot_dimension_numbers<[1], [0], [0], [1], [0, 0, 1, 1], [], []>} : vector<32x64xbf16>, vector<64x64xbf16>, vector<32x64xf32> -> vector<32x64xf32>
    %81 = arith.addf %75, %80 : vector<32x64xf32>
    %c0_70 = arith.constant 0 : index
    %c2_71 = arith.constant 2 : index
    %c0_72 = arith.constant 0 : index
    %82 = vector.load %arg10[%c0_70, %c2_71, %c0_72] : memref<2x18x64xbf16, #tpu.memory_space<vmem>>, vector<2x16x64xbf16>
    %83 = vector.shape_cast %82 : vector<2x16x64xbf16> to vector<32x64xbf16>
    %c2_73 = arith.constant 2 : index
    %c0_74 = arith.constant 0 : index
    %c0_75 = arith.constant 0 : index
    %84 = vector.load %arg4[%c2_73, %c0_74, %c0_75] : memref<3x64x64xbf16, #tpu.memory_space<vmem>>, vector<1x64x64xbf16>
    %85 = vector.shape_cast %84 : vector<1x64x64xbf16> to vector<64x64xbf16>
    %cst_76 = arith.constant dense<0.000000e+00> : vector<32x64xf32>
    %86 = tpu.matmul %83, %85, %cst_76 {dimension_numbers = #tpu.dot_dimension_numbers<[1], [0], [0], [1], [0, 0, 1, 1], [], []>} : vector<32x64xbf16>, vector<64x64xbf16>, vector<32x64xf32> -> vector<32x64xf32>
    %87 = arith.addf %81, %86 : vector<32x64xf32>
    %c0_77 = arith.constant 0 : index
    %c0_78 = arith.constant 0 : index
    %88 = vector.load %arg5[%c0_77, %c0_78] : memref<1x64xf32, #tpu.memory_space<vmem>>, vector<1x64xf32>
    %89 = vector.broadcast %88 : vector<1x64xf32> to vector<32x64xf32>
    %90 = arith.addf %87, %89 : vector<32x64xf32>
    %91 = vector.shape_cast %90 : vector<32x64xf32> to vector<2x16x64xf32>
    %cst_79 = arith.constant dense<0.000000e+00> : vector<2x64xf32>
    %92 = vector.multi_reduction <add>, %91, %cst_79 [1] : vector<2x16x64xf32> to vector<2x64xf32>
    %93 = arith.mulf %91, %91 : vector<2x16x64xf32>
    %cst_80 = arith.constant dense<0.000000e+00> : vector<2x64xf32>
    %94 = vector.multi_reduction <add>, %93, %cst_80 [1] : vector<2x16x64xf32> to vector<2x64xf32>
    %95 = tpu.concatenate %92, %94 in 1 : vector<2x64xf32>, vector<2x64xf32> -> vector<2x128xf32>
    %c0_81 = arith.constant 0 : index
    %c0_82 = arith.constant 0 : index
    %96 = vector.load %arg6[%c0_81, %c0_82] : memref<128x8xf32, #tpu.memory_space<vmem>>, vector<128x8xf32>
    %cst_83 = arith.constant dense<0.000000e+00> : vector<2x8xf32>
    %97 = tpu.matmul %95, %96, %cst_83 {dimension_numbers = #tpu.dot_dimension_numbers<[1], [0], [0], [1], [0, 0, 1, 1], [], []>} : vector<2x128xf32>, vector<128x8xf32>, vector<2x8xf32> -> vector<2x8xf32>
    %98 = vector.extract_strided_slice %97 {offsets = [0, 0], sizes = [2, 4], strides = [1, 1]} : vector<2x8xf32> to vector<2x4xf32>
    %cst_84 = arith.constant 3.906250e-03 : f32
    %99 = vector.broadcast %cst_84 : f32 to vector<2x4xf32>
    %100 = arith.mulf %98, %99 : vector<2x4xf32>
    %101 = vector.extract_strided_slice %97 {offsets = [0, 4], sizes = [2, 4], strides = [1, 1]} : vector<2x8xf32> to vector<2x4xf32>
    %cst_85 = arith.constant 3.906250e-03 : f32
    %102 = vector.broadcast %cst_85 : f32 to vector<2x4xf32>
    %103 = arith.mulf %101, %102 : vector<2x4xf32>
    %104 = arith.mulf %100, %100 : vector<2x4xf32>
    %105 = arith.subf %103, %104 : vector<2x4xf32>
    %cst_86 = arith.constant 9.99999974E-6 : f32
    %106 = vector.broadcast %cst_86 : f32 to vector<2x4xf32>
    %107 = arith.addf %105, %106 : vector<2x4xf32>
    %108 = math.rsqrt %107 : vector<2x4xf32>
    %109 = tpu.concatenate %100, %108 in 1 : vector<2x4xf32>, vector<2x4xf32> -> vector<2x8xf32>
    %c0_87 = arith.constant 0 : index
    %c0_88 = arith.constant 0 : index
    %110 = vector.load %arg7[%c0_87, %c0_88] : memref<8x128xf32, #tpu.memory_space<vmem>>, vector<8x128xf32>
    %cst_89 = arith.constant dense<0.000000e+00> : vector<2x128xf32>
    %111 = tpu.matmul %109, %110, %cst_89 {dimension_numbers = #tpu.dot_dimension_numbers<[1], [0], [0], [1], [0, 0, 1, 1], [], []>} : vector<2x8xf32>, vector<8x128xf32>, vector<2x128xf32> -> vector<2x128xf32>
    %112 = vector.extract_strided_slice %111 {offsets = [0, 0], sizes = [2, 64], strides = [1, 1]} : vector<2x128xf32> to vector<2x64xf32>
    %113 = vector.shape_cast %112 : vector<2x64xf32> to vector<2x1x64xf32>
    %114 = vector.broadcast %113 : vector<2x1x64xf32> to vector<2x16x64xf32>
    %115 = arith.subf %91, %114 : vector<2x16x64xf32>
    %116 = vector.extract_strided_slice %111 {offsets = [0, 64], sizes = [2, 64], strides = [1, 1]} : vector<2x128xf32> to vector<2x64xf32>
    %117 = vector.shape_cast %116 : vector<2x64xf32> to vector<2x1x64xf32>
    %118 = vector.broadcast %117 : vector<2x1x64xf32> to vector<2x16x64xf32>
    %119 = arith.mulf %115, %118 : vector<2x16x64xf32>
    %cst_90 = arith.constant 0.000000e+00 : f32
    %120 = vector.broadcast %cst_90 : f32 to vector<2x16x64xf32>
    %121 = arith.cmpf oge, %119, %120 : vector<2x16x64xf32>
    %cst_91 = arith.constant 2.000000e-01 : f32
    %122 = vector.broadcast %cst_91 : f32 to vector<2x16x64xf32>
    %123 = arith.mulf %122, %119 : vector<2x16x64xf32>
    %124 = arith.select %121, %119, %123 : vector<2x16x64xi1>, vector<2x16x64xf32>
    %c0_92 = arith.constant 0 : index
    %c0_93 = arith.constant 0 : index
    %c0_94 = arith.constant 0 : index
    %125 = vector.load %arg1[%c0_92, %c0_93, %c0_94] : memref<2x16x64xf32, #tpu.memory_space<vmem>>, vector<2x16x64xf32>
    %126 = arith.addf %125, %124 : vector<2x16x64xf32>
    %c0_95 = arith.constant 0 : index
    %c0_96 = arith.constant 0 : index
    %c0_97 = arith.constant 0 : index
    %127 = vector.load %arg8[%c0_95, %c0_96, %c0_97] : memref<2x16x64xf32, #tpu.memory_space<vmem>>, vector<2x16x64xf32>
    tpu.vector_store %arg8[%c0_95, %c0_96, %c0_97], %126 {strides = array<i32>} : memref<2x16x64xf32, #tpu.memory_space<vmem>>, vector<2x16x64xf32>,
    return
  }
  func.func @transform_0(%arg0: i32) -> (i32, i32, i32) {
    %c0_i32 = arith.constant 0 : i32
    %c0_i32_0 = arith.constant 0 : i32
    %c0_i32_1 = arith.constant 0 : i32
    return %arg0, %c0_i32, %c0_i32_0 : i32, i32, i32
  }
  func.func @transform_1(%arg0: i32) -> (i32, i32, i32) {
    %c0_i32 = arith.constant 0 : i32
    %c0_i32_0 = arith.constant 0 : i32
    %c0_i32_1 = arith.constant 0 : i32
    %c0_i32_2 = arith.constant 0 : i32
    return %c0_i32, %c0_i32_0, %c0_i32_1 : i32, i32, i32
  }
  func.func @transform_2(%arg0: i32) -> (i32, i32) {
    %c0_i32 = arith.constant 0 : i32
    %c0_i32_0 = arith.constant 0 : i32
    %c0_i32_1 = arith.constant 0 : i32
    return %c0_i32, %c0_i32_0 : i32, i32
  }
  func.func @transform_3(%arg0: i32) -> (i32, i32, i32) {
    %c0_i32 = arith.constant 0 : i32
    %c0_i32_0 = arith.constant 0 : i32
    %c0_i32_1 = arith.constant 0 : i32
    %c0_i32_2 = arith.constant 0 : i32
    return %c0_i32, %c0_i32_0, %c0_i32_1 : i32, i32, i32
  }
  func.func @transform_4(%arg0: i32) -> (i32, i32) {
    %c0_i32 = arith.constant 0 : i32
    %c0_i32_0 = arith.constant 0 : i32
    %c0_i32_1 = arith.constant 0 : i32
    return %c0_i32, %c0_i32_0 : i32, i32
  }
  func.func @transform_5(%arg0: i32) -> (i32, i32) {
    %c0_i32 = arith.constant 0 : i32
    %c0_i32_0 = arith.constant 0 : i32
    %c0_i32_1 = arith.constant 0 : i32
    return %c0_i32, %c0_i32_0 : i32, i32
  }
  func.func @transform_6(%arg0: i32) -> (i32, i32) {
    %c0_i32 = arith.constant 0 : i32
    %c0_i32_0 = arith.constant 0 : i32
    %c0_i32_1 = arith.constant 0 : i32
    return %c0_i32, %c0_i32_0 : i32, i32
  }
  func.func @transform_7(%arg0: i32) -> (i32, i32, i32) {
    %c0_i32 = arith.constant 0 : i32
    %c0_i32_0 = arith.constant 0 : i32
    %c0_i32_1 = arith.constant 0 : i32
    return %arg0, %c0_i32, %c0_i32_0 : i32, i32, i32
  }
}

</mosaic_0001>

<llo_original>
// kernel: tile.29
$region0: #{tile.29}
  %s0 = inlined_call_operand.vmem [shape: f32[16,4,4], index: 0, kind: input, shape index: {}]
  %s1 = inlined_call_operand.vmem [shape: f32[64,4], index: 1, kind: output, shape index: {}]
  $region1: #{tile.29} parent=0
    #allocation0 [shape = 'u8[4096]{0}', space=vmem, size = 0x1000, scoped, tag = 'scoped mem for output reshape']
    %s2 = smov 3
    %v3 = vld [vmem:[%s0] ss:$16 sm:%s2]
    %s4 = smov 12
    %v5 = vld [vmem:[%s0] ss:$16 sm:%s4]
    %vm6 = vcmask 1043458
    %v7 = vsel %vm6, %v5, %v3
    %vm8 = vcmask 31744
    %9 = vst.msk [vmem:[#allocation0] sm:$0xf] %vm8, %v7
    %s10 = scalar_lea.vmem %s0, 15
    %s11 = smov 3
    %v12 = vld [vmem:[%s10] ss:$16 sm:%s11]
    %s13 = scalar_lea.vmem %s0, 15
    %s14 = smov 12
    %v15 = vld [vmem:[%s13] ss:$16 sm:%s14]
    %vm16 = vcmask 1043458
    %v17 = vsel %vm16, %v15, %v12
    %18 = vrot.lane.b32.xlu0 %v17, 60
    %v19 = vpop.permute.xlu0 %18
    %vm20 = vcmask 523744
    %21 = vst.msk [vmem:[#allocation0] sm:$0xf] %vm20, %v19
    %s22 = scalar_lea.vmem %s0, 14
    %s23 = smov 3
    %v24 = vld [vmem:[%s22] ss:$16 sm:%s23]
    %s25 = scalar_lea.vmem %s0, 14
    %s26 = smov 12
    %v27 = vld [vmem:[%s25] ss:$16 sm:%s26]
    %vm28 = vcmask 1043458
    %v29 = vsel %vm28, %v27, %v24
    %30 = vrot.lane.b32.xlu0 %v29, 56
    %v31 = vpop.permute.xlu0 %30
    %vm32 = vcmask 490944
    %33 = vst.msk [vmem:[#allocation0] sm:$0xf] %vm32, %v31
    %s34 = scalar_lea.vmem %s0, 13
    %s35 = smov 3
    %v36 = vld [vmem:[%s34] ss:$16 sm:%s35]
    %s37 = scalar_lea.vmem %s0, 13
    %s38 = smov 12
    %v39 = vld [vmem:[%s37] ss:$16 sm:%s38]
    %vm40 = vcmask 1043458
    %v41 = vsel %vm40, %v39, %v36
    %42 = vrot.lane.b32.xlu0 %v41, 52
    %v43 = vpop.permute.xlu0 %42
    %vm44 = vcmask 458144
    %45 = vst.msk [vmem:[#allocation0] sm:$0xf] %vm44, %v43
    %s46 = scalar_lea.vmem %s0, 12
    %s47 = smov 3
    %v48 = vld [vmem:[%s46] ss:$16 sm:%s47]
    %s49 = scalar_lea.vmem %s0, 12
    %s50 = smov 12
    %v51 = vld [vmem:[%s49] ss:$16 sm:%s50]
    %vm52 = vcmask 1043458
    %v53 = vsel %vm52, %v51, %v48
    %54 = vrot.lane.b32.xlu0 %v53, 48
    %v55 = vpop.permute.xlu0 %54
    %vm56 = vcmask 425344
    %57 = vst.msk [vmem:[#allocation0] sm:$0xf] %vm56, %v55
    %s58 = scalar_lea.vmem %s0, 11
    %s59 = smov 3
    %v60 = vld [vmem:[%s58] ss:$16 sm:%s59]
    %s61 = scalar_lea.vmem %s0, 11
    %s62 = smov 12
    %v63 = vld [vmem:[%s61] ss:$16 sm:%s62]
    %vm64 = vcmask 1043458
    %v65 = vsel %vm64, %v63, %v60
    %66 = vrot.lane.b32.xlu0 %v65, 44
    %v67 = vpop.permute.xlu0 %66
    %vm68 = vcmask 392544
    %69 = vst.msk [vmem:[#allocation0] sm:$0xf] %vm68, %v67
    %s70 = scalar_lea.vmem %s0, 10
    %s71 = smov 3
    %v72 = vld [vmem:[%s70] ss:$16 sm:%s71]
    %s73 = scalar_lea.vmem %s0, 10
    %s74 = smov 12
    %v75 = vld [vmem:[%s73] ss:$16 sm:%s74]
    %vm76 = vcmask 1043458
    %v77 = vsel %vm76, %v75, %v72
    %78 = vrot.lane.b32.xlu0 %v77, 40
    %v79 = vpop.permute.xlu0 %78
    %vm80 = vcmask 359744
    %81 = vst.msk [vmem:[#allocation0] sm:$0xf] %vm80, %v79
    %s82 = scalar_lea.vmem %s0, 9
    %s83 = smov 3
    %v84 = vld [vmem:[%s82] ss:$16 sm:%s83]
    %s85 = scalar_lea.vmem %s0, 9
    %s86 = smov 12
    %v87 = vld [vmem:[%s85] ss:$16 sm:%s86]
    %vm88 = vcmask 1043458
    %v89 = vsel %vm88, %v87, %v84
    %90 = vrot.lane.b32.xlu0 %v89, 36
    %v91 = vpop.permute.xlu0 %90
    %vm92 = vcmask 326944
    %93 = vst.msk [vmem:[#allocation0] sm:$0xf] %vm92, %v91
    %s94 = scalar_lea.vmem %s0, 8
    %s95 = smov 3
    %v96 = vld [vmem:[%s94] ss:$16 sm:%s95]
    %s97 = scalar_lea.vmem %s0, 8
    %s98 = smov 12
    %v99 = vld [vmem:[%s97] ss:$16 sm:%s98]
    %vm100 = vcmask 1043458
    %v101 = vsel %vm100, %v99, %v96
    %102 = vrot.lane.b32.xlu0 %v101, 32
    %v103 = vpop.permute.xlu0 %102
    %vm104 = vcmask 294144
    %105 = vst.msk [vmem:[#allocation0] sm:$0xf] %vm104, %v103
    %s106 = scalar_lea.vmem %s0, 7
    %s107 = smov 3
    %v108 = vld [vmem:[%s106] ss:$16 sm:%s107]
    %s109 = scalar_lea.vmem %s0, 7
    %s110 = smov 12
    %v111 = vld [vmem:[%s109] ss:$16 sm:%s110]
    %vm112 = vcmask 1043458
    %v113 = vsel %vm112, %v111, %v108
    %114 = vrot.lane.b32.xlu0 %v113, 28
    %v115 = vpop.permute.xlu0 %114
    %vm116 = vcmask 261344
    %117 = vst.msk [vmem:[#allocation0] sm:$0xf] %vm116, %v115
    %s118 = scalar_lea.vmem %s0, 6
    %s119 = smov 3
    %v120 = vld [vmem:[%s118] ss:$16 sm:%s119]
    %s121 = scalar_lea.vmem %s0, 6
    %s122 = smov 12
    %v123 = vld [vmem:[%s121] ss:$16 sm:%s122]
    %vm124 = vcmask 1043458
    %v125 = vsel %vm124, %v123, %v120
    %126 = vrot.lane.b32.xlu0 %v125, 24
    %v127 = vpop.permute.xlu0 %126
    %vm128 = vcmask 228544
    %129 = vst.msk [vmem:[#allocation0] sm:$0xf] %vm128, %v127
    %s130 = scalar_lea.vmem %s0, 5
    %s131 = smov 3
    %v132 = vld [vmem:[%s130] ss:$16 sm:%s131]
    %s133 = scalar_lea.vmem %s0, 5
    %s134 = smov 12
    %v135 = vld [vmem:[%s133] ss:$16 sm:%s134]
    %vm136 = vcmask 1043458
    %v137 = vsel %vm136, %v135, %v132
    %138 = vrot.lane.b32.xlu0 %v137, 20
    %v139 = vpop.permute.xlu0 %138
    %vm140 = vcmask 195744
    %141 = vst.msk [vmem:[#allocation0] sm:$0xf] %vm140, %v139
    %s142 = scalar_lea.vmem %s0, 4
    %s143 = smov 3
    %v144 = vld [vmem:[%s142] ss:$16 sm:%s143]
    %s145 = scalar_lea.vmem %s0, 4
    %s146 = smov 12
    %v147 = vld [vmem:[%s145] ss:$16 sm:%s146]
    %vm148 = vcmask 1043458
    %v149 = vsel %vm148, %v147, %v144
    %150 = vrot.lane.b32.xlu0 %v149, 16
    %v151 = vpop.permute.xlu0 %150
    %vm152 = vcmask 162944
    %153 = vst.msk [vmem:[#allocation0] sm:$0xf] %vm152, %v151
    %s154 = scalar_lea.vmem %s0, 3
    %s155 = smov 3
    %v156 = vld [vmem:[%s154] ss:$16 sm:%s155]
    %s157 = scalar_lea.vmem %s0, 3
    %s158 = smov 12
    %v159 = vld [vmem:[%s157] ss:$16 sm:%s158]
    %vm160 = vcmask 1043458
    %v161 = vsel %vm160, %v159, %v156
    %162 = vrot.lane.b32.xlu0 %v161, 12
    %v163 = vpop.permute.xlu0 %162
    %vm164 = vcmask 130144
    %165 = vst.msk [vmem:[#allocation0] sm:$0xf] %vm164, %v163
    %s166 = scalar_lea.vmem %s0, 2
    %s167 = smov 3
    %v168 = vld [vmem:[%s166] ss:$16 sm:%s167]
    %s169 = scalar_lea.vmem %s0, 2
    %s170 = smov 12
    %v171 = vld [vmem:[%s169] ss:$16 sm:%s170]
    %vm172 = vcmask 1043458
    %v173 = vsel %vm172, %v171, %v168
    %174 = vrot.lane.b32.xlu0 %v173, 8
    %v175 = vpop.permute.xlu0 %174
    %vm176 = vcmask 97344
    %177 = vst.msk [vmem:[#allocation0] sm:$0xf] %vm176, %v175
    %s178 = scalar_lea.vmem %s0, 1
    %s179 = smov 3
    %v180 = vld [vmem:[%s178] ss:$16 sm:%s179]
    %s181 = scalar_lea.vmem %s0, 1
    %s182 = smov 12
    %v183 = vld [vmem:[%s181] ss:$16 sm:%s182]
    %vm184 = vcmask 1043458
    %v185 = vsel %vm184, %v183, %v180
    %186 = vrot.lane.b32.xlu0 %v185, 4
    %v187 = vpop.permute.xlu0 %186
    %vm188 = vcmask 64544
    %189 = vst.msk [vmem:[#allocation0] sm:$0xf] %vm188, %v187
    %s191 = sshllo.u32 0, 4
    %v193 = vld [vmem:[#allocation0] sm:%s191]
    %s194 = sshllo.u32 0, 4
    %195 = vst [vmem:[%s1] sm:%s194] %v193

// kernel: tile.18
$region0: #{tile.18}
  #allocation0 [shape = 's32[1]{0}', space=sflag, size = 0x4, scoped, tag = 'scoped memory for tile.18']
  %s0 = inlined_call_operand.vmem [shape: f32[4], index: 0, kind: input, shape index: {}]
  %s1 = inlined_call_operand.vmem [shape: f32[16,4], index: 1, kind: output, shape index: {}]
  // Predicated region
  $region2: #{tile.18} parent=0 // pred_check
    _
  $region3: #{tile.18} parent=0 // pred_check_branch
    %3 = sbr.rel (0) target = $region5
  $region4: #{tile.18} parent=0 // pred_region
    _
  $region5: #{tile.18} parent=0 // pred_fallthru
    _
  %v4 = vld [vmem:[%s0] ss:$0 sm:$0xff]
  %5 = vst [vmem:[%s1] sm:$0xff] %v4
  %s6 = scalar_lea.vmem %s1, 8
  %7 = vst [vmem:[%s6] sm:$0xff] %v4

// kernel: tile.19
$region0: #{tile.19}
  %s0 = inlined_call_operand.vmem [shape: f32[16,4], index: 0, kind: input, shape index: {}]
  %s1 = inlined_call_operand.vmem [shape: f32[1,64], index: 1, kind: output, shape index: {}]
  $region1: #{tile.19} parent=0
    #allocation0 [shape = 'u8[4096]{0}', space=vmem, size = 0x1000, scoped, tag = 'scoped mem for output reshape']
    %v2 = vld [vmem:[%s0] sm:$0x1]
    %vm3 = vcmask 31744
    %4 = vst.msk [vmem:[#allocation0] sm:$0x1] %vm3, %v2
    %s5 = scalar_lea.vmem %s0, 15
    %v6 = vld [vmem:[%s5] sm:$0x1]
    %7 = vrot.lane.b32.xlu0 %v6, 60
    %v8 = vpop.permute.xlu0 %7
    %vm9 = vcmask 523744
    %10 = vst.msk [vmem:[#allocation0] sm:$0x1] %vm9, %v8
    %s11 = scalar_lea.vmem %s0, 14
    %v12 = vld [vmem:[%s11] sm:$0x1]
    %13 = vrot.lane.b32.xlu0 %v12, 56
    %v14 = vpop.permute.xlu0 %13
    %vm15 = vcmask 490944
    %16 = vst.msk [vmem:[#allocation0] sm:$0x1] %vm15, %v14
    %s17 = scalar_lea.vmem %s0, 13
    %v18 = vld [vmem:[%s17] sm:$0x1]
    %19 = vrot.lane.b32.xlu0 %v18, 52
    %v20 = vpop.permute.xlu0 %19
    %vm21 = vcmask 458144
    %22 = vst.msk [vmem:[#allocation0] sm:$0x1] %vm21, %v20
    %s23 = scalar_lea.vmem %s0, 12
    %v24 = vld [vmem:[%s23] sm:$0x1]
    %25 = vrot.lane.b32.xlu0 %v24, 48
    %v26 = vpop.permute.xlu0 %25
    %vm27 = vcmask 425344
    %28 = vst.msk [vmem:[#allocation0] sm:$0x1] %vm27, %v26
    %s29 = scalar_lea.vmem %s0, 11
    %v30 = vld [vmem:[%s29] sm:$0x1]
    %31 = vrot.lane.b32.xlu0 %v30, 44
    %v32 = vpop.permute.xlu0 %31
    %vm33 = vcmask 392544
    %34 = vst.msk [vmem:[#allocation0] sm:$0x1] %vm33, %v32
    %s35 = scalar_lea.vmem %s0, 10
    %v36 = vld [vmem:[%s35] sm:$0x1]
    %37 = vrot.lane.b32.xlu0 %v36, 40
    %v38 = vpop.permute.xlu0 %37
    %vm39 = vcmask 359744
    %40 = vst.msk [vmem:[#allocation0] sm:$0x1] %vm39, %v38
    %s41 = scalar_lea.vmem %s0, 9
    %v42 = vld [vmem:[%s41] sm:$0x1]
    %43 = vrot.lane.b32.xlu0 %v42, 36
    %v44 = vpop.permute.xlu0 %43
    %vm45 = vcmask 326944
    %46 = vst.msk [vmem:[#allocation0] sm:$0x1] %vm45, %v44
    %s47 = scalar_lea.vmem %s0, 8
    %v48 = vld [vmem:[%s47] sm:$0x1]
    %49 = vrot.lane.b32.xlu0 %v48, 32
    %v50 = vpop.permute.xlu0 %49
    %vm51 = vcmask 294144
    %52 = vst.msk [vmem:[#allocation0] sm:$0x1] %vm51, %v50
    %s53 = scalar_lea.vmem %s0, 7
    %v54 = vld [vmem:[%s53] sm:$0x1]
    %55 = vrot.lane.b32.xlu0 %v54, 28
    %v56 = vpop.permute.xlu0 %55
    %vm57 = vcmask 261344
    %58 = vst.msk [vmem:[#allocation0] sm:$0x1] %vm57, %v56
    %s59 = scalar_lea.vmem %s0, 6
    %v60 = vld [vmem:[%s59] sm:$0x1]
    %61 = vrot.lane.b32.xlu0 %v60, 24
    %v62 = vpop.permute.xlu0 %61
    %vm63 = vcmask 228544
    %64 = vst.msk [vmem:[#allocation0] sm:$0x1] %vm63, %v62
    %s65 = scalar_lea.vmem %s0, 5
    %v66 = vld [vmem:[%s65] sm:$0x1]
    %67 = vrot.lane.b32.xlu0 %v66, 20
    %v68 = vpop.permute.xlu0 %67
    %vm69 = vcmask 195744
    %70 = vst.msk [vmem:[#allocation0] sm:$0x1] %vm69, %v68
    %s71 = scalar_lea.vmem %s0, 4
    %v72 = vld [vmem:[%s71] sm:$0x1]
    %73 = vrot.lane.b32.xlu0 %v72, 16
    %v74 = vpop.permute.xlu0 %73
    %vm75 = vcmask 162944
    %76 = vst.msk [vmem:[#allocation0] sm:$0x1] %vm75, %v74
    %s77 = scalar_lea.vmem %s0, 3
    %v78 = vld [vmem:[%s77] sm:$0x1]
    %79 = vrot.lane.b32.xlu0 %v78, 12
    %v80 = vpop.permute.xlu0 %79
    %vm81 = vcmask 130144
    %82 = vst.msk [vmem:[#allocation0] sm:$0x1] %vm81, %v80
    %s83 = scalar_lea.vmem %s0, 2
    %v84 = vld [vmem:[%s83] sm:$0x1]
    %85 = vrot.lane.b32.xlu0 %v84, 8
    %v86 = vpop.permute.xlu0 %85
    %vm87 = vcmask 97344
    %88 = vst.msk [vmem:[#allocation0] sm:$0x1] %vm87, %v86
    %s89 = scalar_lea.vmem %s0, 1
    %v90 = vld [vmem:[%s89] sm:$0x1]
    %91 = vrot.lane.b32.xlu0 %v90, 4
    %v92 = vpop.permute.xlu0 %91
    %vm93 = vcmask 64544
    %94 = vst.msk [vmem:[#allocation0] sm:$0x1] %vm93, %v92
    %s96 = sshllo.u32 0, 1
    %v98 = vld [vmem:[#allocation0] sm:%s96]
    %s99 = sshllo.u32 0, 1
    %100 = vst [vmem:[%s1] sm:%s99] %v98

// kernel: feed_forward_pallas.1
$region0: #{feed_forward_pallas.1}
  #allocation0 [shape = 'u32[]', space=smem, size = 0x4, offset = 0x4, fixed_abs, tag = 'smem constant byte address 0x4 - core index']
  #allocation1 [shape = 'u32[144,128]{1,0:T(1,128)}', space=vmem, size = 0x12000, scoped, tag = 'internal scratch']
  #allocation2 [shape = 'bf16[2,20,64]{2,1,0:T(8,128)(2,1)}', space=vmem, size = 0x3000, scoped, tag = 'scratch operand']
  #allocation3 [shape = 'bf16[2,18,64]{2,1,0:T(8,128)(2,1)}', space=vmem, size = 0x3000, scoped, tag = 'scratch operand']
  %s0 = inlined_call_operand.vmem [shape: f32[2,16,64], index: 0, kind: input, shape index: {}]
  %s1 = inlined_call_operand.vmem [shape: bf16[3,64,64], index: 1, kind: input, shape index: {}]
  %s2 = inlined_call_operand.vmem [shape: f32[1,64], index: 2, kind: input, shape index: {}]
  %s3 = inlined_call_operand.vmem [shape: bf16[3,64,64], index: 3, kind: input, shape index: {}]
  %s4 = inlined_call_operand.vmem [shape: f32[1,64], index: 4, kind: input, shape index: {}]
  %s5 = inlined_call_operand.vmem [shape: f32[128,8], index: 5, kind: input, shape index: {}]
  %s6 = inlined_call_operand.vmem [shape: f32[8,128], index: 6, kind: input, shape index: {}]
  %s7 = inlined_call_operand.vmem [shape: f32[2,16,64], index: 7, kind: output, shape index: {}]
  %s8 = sld [smem:[#allocation0]]
  $region38: #{feed_forward_pallas.1} parent=0
    _
  %s10 = ssub.s32 1, %s8
  %s11 = scalar_select 0, %s10, %s8
  // Predicated region
  $region2: #{feed_forward_pallas.1} parent=0 // pred_check
    _
  $region3: #{feed_forward_pallas.1} parent=0 // pred_check_branch
    %13 = sbr.rel (0) target = $region5
  $region4: #{feed_forward_pallas.1} parent=0 // pred_region
    _
  $region5: #{feed_forward_pallas.1} parent=0 // pred_fallthru
    _
  // Predicated region
  $region6: #{feed_forward_pallas.1} parent=0 // pred_check
    _
  $region7: #{feed_forward_pallas.1} parent=0 // pred_check_branch
    %15 = sbr.rel (0) target = $region9
  $region8: #{feed_forward_pallas.1} parent=0 // pred_region
    _
  $region9: #{feed_forward_pallas.1} parent=0 // pred_fallthru
    _
  // Predicated region
  $region10: #{feed_forward_pallas.1} parent=0 // pred_check
    _
  $region11: #{feed_forward_pallas.1} parent=0 // pred_check_branch
    %17 = sbr.rel (0) target = $region13
  $region12: #{feed_forward_pallas.1} parent=0 // pred_region
    _
  $region13: #{feed_forward_pallas.1} parent=0 // pred_fallthru
    _
  // Predicated region
  $region14: #{feed_forward_pallas.1} parent=0 // pred_check
    _
  $region15: #{feed_forward_pallas.1} parent=0 // pred_check_branch
    %19 = sbr.rel (0) target = $region17
  $region16: #{feed_forward_pallas.1} parent=0 // pred_region
    _
  $region17: #{feed_forward_pallas.1} parent=0 // pred_fallthru
    _
  // Predicated region
  $region18: #{feed_forward_pallas.1} parent=0 // pred_check
    _
  $region19: #{feed_forward_pallas.1} parent=0 // pred_check_branch
    %21 = sbr.rel (0) target = $region21
  $region20: #{feed_forward_pallas.1} parent=0 // pred_region
    _
  $region21: #{feed_forward_pallas.1} parent=0 // pred_fallthru
    _
  // Predicated region
  $region22: #{feed_forward_pallas.1} parent=0 // pred_check
    _
  $region23: #{feed_forward_pallas.1} parent=0 // pred_check_branch
    %23 = sbr.rel (0) target = $region25
  $region24: #{feed_forward_pallas.1} parent=0 // pred_region
    _
  $region25: #{feed_forward_pallas.1} parent=0 // pred_fallthru
    _
  // Predicated region
  $region26: #{feed_forward_pallas.1} parent=0 // pred_check
    _
  $region27: #{feed_forward_pallas.1} parent=0 // pred_check_branch
    %25 = sbr.rel (0) target = $region29
  $region28: #{feed_forward_pallas.1} parent=0 // pred_region
    _
  $region29: #{feed_forward_pallas.1} parent=0 // pred_fallthru
    _
  %vm27 = vcmask 516096
  %28 = vst.msk [vmem:[#allocation2] sm:$0x1] %vm27, 0
  %29 = vst.msk [vmem:[#allocation2 + $0xc] sm:$0x1] %vm27, 0
  %vm30 = vcmask 517121
  %31 = vst.msk [vmem:[#allocation2 + $0x8] sm:$0x2] %vm30, 0
  %32 = vst.msk [vmem:[#allocation2 + $0x14] sm:$0x2] %vm30, 0
  %v33 = vld [vmem:[%s0] sm:$0xff]
  %v34 = vld [vmem:[%s0 + $0x8] sm:$0xff]
  %v35 = vld [vmem:[%s0 + $0x10] sm:$0xff]
  %v36 = vld [vmem:[%s0 + $0x18] sm:$0xff]
  %v37 = vpack.c.bf16 %v34, %v33
  %v38 = vpack.c.bf16 %v36, %v35
  %v41 = vunpack.c.l.b16 %v37
  %v42 = vunpack.c.h.b16 %v37
  %v43 = vunpack.c.l.b16 %v38
  %v44 = vunpack.c.h.b16 %v38
  %v45 = vpack.c.b16 %v41, %v41
  %v46 = vpack.c.b16 %v42, %v42
  %v47 = vpack.c.b16 %v43, %v43
  %v48 = vpack.c.b16 %v44, %v44
  %vm49 = vcmask 1040384
  %vm50 = vcmask 1044484
  %vm51 = vmor %vm49, %vm50
  %v52 = vrot.slane %v45, 7
  %v53 = vrot.slane %v52, 4
  %v54 = vrot.slane %v46, 7
  %v55 = vsel %vm51, %v53, %v54
  %v56 = vrot.slane %v54, 4
  %v57 = vrot.slane %v47, 7
  %v58 = vrot.slane %v57, 4
  %v59 = vrot.slane %v48, 7
  %v60 = vsel %vm51, %v58, %v59
  %v61 = vrot.slane %v59, 4
  %vm68 = vcmask 519169
  %69 = vst.msk [vmem:[#allocation2] sm:$0xe] %vm68, %v52
  %vm70 = vcmask 519168
  %71 = vst.msk [vmem:[#allocation2 + $0x4] sm:$0xf] %vm70, %v55
  %72 = vst.msk [vmem:[#allocation2 + $0x8] sm:$0x1] %vm27, %v56
  %73 = vst.msk [vmem:[#allocation2 + $0xc] sm:$0xe] %vm68, %v57
  %74 = vst.msk [vmem:[#allocation2 + $0x10] sm:$0xf] %vm70, %v60
  %75 = vst.msk [vmem:[#allocation2 + $0x14] sm:$0x1] %vm27, %v61
  %v76 = vld [vmem:[#allocation2] sm:$0xf]
  %v77 = vld [vmem:[#allocation2 + $0x4] sm:$0xf]
  %v78 = vld [vmem:[#allocation2 + $0xc] sm:$0xf]
  %v79 = vld [vmem:[#allocation2 + $0x10] sm:$0xf]
  %v80 = vld [vmem:[%s1] sm:$0xf]
  %v81 = vld [vmem:[%s1 + $0x4] sm:$0xf]
  %v82 = vld [vmem:[%s1 + $0x8] sm:$0xf]
  %v83 = vld [vmem:[%s1 + $0xc] sm:$0xf]
  %v84 = vld [vmem:[%s1 + $0x10] sm:$0xf]
  %v85 = vld [vmem:[%s1 + $0x14] sm:$0xf]
  %v86 = vld [vmem:[%s1 + $0x18] sm:$0xf]
  %v87 = vld [vmem:[%s1 + $0x1c] sm:$0xf]
  %v88 = vld [vmem:[#allocation2] sm:$0xe]
  %v89 = vld [vmem:[#allocation2 + $0x8] sm:$0x1]
  %v90 = vld [vmem:[#allocation2 + $0xc] sm:$0xe]
  %v91 = vld [vmem:[#allocation2 + $0x14] sm:$0x1]
  %vm98 = vcmask 1042432
  %vm99 = vcmask 1046532
  %vm100 = vmor %vm98, %vm99
  %v101 = vrot.slane %v88, 5
  %v102 = vrot.slane %v101, 4
  %v103 = vrot.slane %v77, 5
  %v104 = vsel %vm100, %v102, %v103
  %v105 = vrot.slane %v103, 4
  %v106 = vrot.slane %v89, 5
  %v107 = vsel %vm100, %v105, %v106
  %v108 = vrot.slane %v90, 5
  %v109 = vrot.slane %v108, 4
  %v110 = vrot.slane %v79, 5
  %v111 = vsel %vm100, %v109, %v110
  %v112 = vrot.slane %v110, 4
  %v113 = vrot.slane %v91, 5
  %v114 = vsel %vm100, %v112, %v113
  %s115 = scalar_lea.vmem %s1, 32
  %v116 = vld [vmem:[%s115] sm:$0xf]
  %v117 = vld [vmem:[%s115 + $0x4] sm:$0xf]
  %v118 = vld [vmem:[%s115 + $0x8] sm:$0xf]
  %v119 = vld [vmem:[%s115 + $0xc] sm:$0xf]
  %v120 = vld [vmem:[%s115 + $0x10] sm:$0xf]
  %v121 = vld [vmem:[%s115 + $0x14] sm:$0xf]
  %v122 = vld [vmem:[%s115 + $0x18] sm:$0xf]
  %v123 = vld [vmem:[%s115 + $0x1c] sm:$0xf]
  %v124 = vunpack.c.l.b16 %v104
  %v125 = vunpack.c.l.b16 %v107
  %v126 = vunpack.c.l.b16 %v111
  %v127 = vunpack.c.l.b16 %v114
  %v128 = vpack.c.b16 %v125, %v124
  %v129 = vpack.c.b16 %v127, %v126
  %v138 = vunpack.c.l.b16 %v116
  %v139 = vunpack.c.l.b16 %v117
  %v140 = vunpack.c.l.b16 %v118
  %v141 = vunpack.c.l.b16 %v119
  %v142 = vunpack.c.l.b16 %v120
  %v143 = vunpack.c.l.b16 %v121
  %v144 = vunpack.c.l.b16 %v122
  %v145 = vunpack.c.l.b16 %v123
  %v146 = vpack.c.b16 %v139, %v138
  %v147 = vpack.c.b16 %v141, %v140
  %v148 = vpack.c.b16 %v143, %v142
  %v149 = vpack.c.b16 %v145, %v144
  %vm154 = vcmask 523264
  %v156 = vsel %vm154, %v128, 0
  %v159 = vsel %vm154, %v129, 0
  %161 = vmatprep.subr.bf16.mxu0 0
  %162 = vmatpush1.bf16.msra.mxu0 %v146
  %163 = vmatprep.subr.bf16.mxu0 0
  %164 = vmatpush1.bf16.msra.mxu0 %v147
  %165 = vmatprep.subr.bf16.mxu0 0
  %166 = vmatpush1.bf16.msra.mxu0 %v148
  %167 = vmatprep.subr.bf16.mxu0 0
  %168 = vmatpush1.bf16.msra.mxu0 %v149
  %169 = vmatprep.subr.bf16.mxu0 0
  %170 = vmatpush1.bf16.msra.mxu0 0
  %171 = vmatprep.subr.bf16.mxu0 0
  %172 = vmatpush1.bf16.msra.mxu0 0
  %173 = vmatprep.subr.bf16.mxu0 0
  %174 = vmatpush1.bf16.msra.mxu0 0
  %175 = vmatprep.subr.bf16.mxu0 0
  %176 = vmatpush1.bf16.msra.mxu0 0
  %177 = vmatprep.subr.bf16.mxu0 0
  %178 = vmatpush1.bf16.msra.mxu0 0
  %179 = vmatprep.subr.bf16.mxu0 0
  %180 = vmatpush1.bf16.msra.mxu0 0
  %181 = vmatprep.subr.bf16.mxu0 0
  %182 = vmatpush1.bf16.msra.mxu0 0
  %183 = vmatprep.subr.bf16.mxu0 0
  %184 = vmatpush1.bf16.msra.mxu0 0
  %185 = vmatprep.subr.bf16.mxu0 0
  %186 = vmatpush1.bf16.msra.mxu0 0
  %187 = vmatprep.subr.bf16.mxu0 0
  %188 = vmatpush1.bf16.msra.mxu0 0
  %189 = vmatprep.subr.bf16.mxu0 0
  %190 = vmatpush1.bf16.msra.mxu0 0
  %191 = vmatprep.subr.bf16.mxu0 0
  %192 = vmatpush1.bf16.msra.mxu0 0
  %193 = vmatprep.mubr.bf16.mxu0 0
  %194 = vmatmul.mubr.bf16.gmra.mrb[0].mxu0 %v156
  %v195 = vpop.f32.mrb[0].mxu0
  %v196 = vadd.f32 0.0, %v195
  %v197 = vpop.f32.mrb[0].mxu0
  %v198 = vpop.f32.mrb[0].mxu0
  %v199 = vadd.f32 0.0, %v198
  %v200 = vpop.f32.mrb[0].mxu0
  %201 = vmatprep.mubr.bf16.mxu0 0
  %202 = vmatmul.mubr.bf16.gmra.mrb[0].mxu0 %v159
  %v203 = vpop.f32.mrb[0].mxu0
  %v204 = vadd.f32 0.0, %v203
  %v205 = vpop.f32.mrb[0].mxu0
  %v206 = vpop.f32.mrb[0].mxu0
  %v207 = vadd.f32 0.0, %v206
  %v208 = vpop.f32.mrb[0].mxu0
  %209 = vdwg.mxu0
  %v212 = vunpack.c.l.b16 %v76
  %v213 = vunpack.c.l.b16 %v77
  %v214 = vunpack.c.l.b16 %v78
  %v215 = vunpack.c.l.b16 %v79
  %v216 = vpack.c.b16 %v213, %v212
  %v217 = vpack.c.b16 %v215, %v214
  %v226 = vunpack.c.l.b16 %v80
  %v227 = vunpack.c.l.b16 %v81
  %v228 = vunpack.c.l.b16 %v82
  %v229 = vunpack.c.l.b16 %v83
  %v230 = vunpack.c.l.b16 %v84
  %v231 = vunpack.c.l.b16 %v85
  %v232 = vunpack.c.l.b16 %v86
  %v233 = vunpack.c.l.b16 %v87
  %v234 = vpack.c.b16 %v227, %v226
  %v235 = vpack.c.b16 %v229, %v228
  %v236 = vpack.c.b16 %v231, %v230
  %v237 = vpack.c.b16 %v233, %v232
  %v243 = vsel %vm154, %v216, 0
  %v246 = vsel %vm154, %v217, 0
  %248 = vmatprep.subr.bf16.mxu0 0
  %249 = vmatpush1.bf16.msra.mxu0 %v234
  %250 = vmatprep.subr.bf16.mxu0 0
  %251 = vmatpush1.bf16.msra.mxu0 %v235
  %252 = vmatprep.subr.bf16.mxu0 0
  %253 = vmatpush1.bf16.msra.mxu0 %v236
  %254 = vmatprep.subr.bf16.mxu0 0
  %255 = vmatpush1.bf16.msra.mxu0 %v237
  %256 = vmatprep.subr.bf16.mxu0 0
  %257 = vmatpush1.bf16.msra.mxu0 0
  %258 = vmatprep.subr.bf16.mxu0 0
  %259 = vmatpush1.bf16.msra.mxu0 0
  %260 = vmatprep.subr.bf16.mxu0 0
  %261 = vmatpush1.bf16.msra.mxu0 0
  %262 = vmatprep.subr.bf16.mxu0 0
  %263 = vmatpush1.bf16.msra.mxu0 0
  %264 = vmatprep.subr.bf16.mxu0 0
  %265 = vmatpush1.bf16.msra.mxu0 0
  %266 = vmatprep.subr.bf16.mxu0 0
  %267 = vmatpush1.bf16.msra.mxu0 0
  %268 = vmatprep.subr.bf16.mxu0 0
  %269 = vmatpush1.bf16.msra.mxu0 0
  %270 = vmatprep.subr.bf16.mxu0 0
  %271 = vmatpush1.bf16.msra.mxu0 0
  %272 = vmatprep.subr.bf16.mxu0 0
  %273 = vmatpush1.bf16.msra.mxu0 0
  %274 = vmatprep.subr.bf16.mxu0 0
  %275 = vmatpush1.bf16.msra.mxu0 0
  %276 = vmatprep.subr.bf16.mxu0 0
  %277 = vmatpush1.bf16.msra.mxu0 0
  %278 = vmatprep.subr.bf16.mxu0 0
  %279 = vmatpush1.bf16.msra.mxu0 0
  %280 = vmatprep.mubr.bf16.mxu0 0
  %281 = vmatmul.mubr.bf16.gmra.mrb[0].mxu0 %v243
  %v282 = vpop.f32.mrb[0].mxu0
  %v283 = vadd.f32 %v196, %v282
  %v284 = vpop.f32.mrb[0].mxu0
  %v285 = vpop.f32.mrb[0].mxu0
  %v286 = vadd.f32 %v199, %v285
  %v287 = vpop.f32.mrb[0].mxu0
  %288 = vmatprep.mubr.bf16.mxu0 0
  %289 = vmatmul.mubr.bf16.gmra.mrb[0].mxu0 %v246
  %v290 = vpop.f32.mrb[0].mxu0
  %v291 = vadd.f32 %v204, %v290
  %v292 = vpop.f32.mrb[0].mxu0
  %v293 = vpop.f32.mrb[0].mxu0
  %v294 = vadd.f32 %v207, %v293
  %v295 = vpop.f32.mrb[0].mxu0
  %296 = vdwg.mxu0
  %v297 = vld [vmem:[#allocation2] sm:$0xc]
  %v298 = vld [vmem:[#allocation2 + $0x8] sm:$0x3]
  %v299 = vld [vmem:[#allocation2 + $0xc] sm:$0xc]
  %v300 = vld [vmem:[#allocation2 + $0x14] sm:$0x3]
  %vm305 = vcmask 1041408
  %vm306 = vcmask 1045508
  %vm307 = vmor %vm305, %vm306
  %v308 = vrot.slane %v297, 6
  %v309 = vrot.slane %v308, 4
  %v310 = vrot.slane %v77, 6
  %v311 = vsel %vm307, %v309, %v310
  %v312 = vrot.slane %v310, 4
  %v313 = vrot.slane %v298, 6
  %v314 = vsel %vm307, %v312, %v313
  %v315 = vrot.slane %v299, 6
  %v316 = vrot.slane %v315, 4
  %v317 = vrot.slane %v79, 6
  %v318 = vsel %vm307, %v316, %v317
  %v319 = vrot.slane %v317, 4
  %v320 = vrot.slane %v300, 6
  %v321 = vsel %vm307, %v319, %v320
  %s322 = scalar_lea.vmem %s1, 64
  %v323 = vld [vmem:[%s322] sm:$0xf]
  %v324 = vld [vmem:[%s322 + $0x4] sm:$0xf]
  %v325 = vld [vmem:[%s322 + $0x8] sm:$0xf]
  %v326 = vld [vmem:[%s322 + $0xc] sm:$0xf]
  %v327 = vld [vmem:[%s322 + $0x10] sm:$0xf]
  %v328 = vld [vmem:[%s322 + $0x14] sm:$0xf]
  %v329 = vld [vmem:[%s322 + $0x18] sm:$0xf]
  %v330 = vld [vmem:[%s322 + $0x1c] sm:$0xf]
  %v331 = vunpack.c.l.b16 %v311
  %v332 = vunpack.c.l.b16 %v314
  %v333 = vunpack.c.l.b16 %v318
  %v334 = vunpack.c.l.b16 %v321
  %v335 = vpack.c.b16 %v332, %v331
  %v336 = vpack.c.b16 %v334, %v333
  %v345 = vunpack.c.l.b16 %v323
  %v346 = vunpack.c.l.b16 %v324
  %v347 = vunpack.c.l.b16 %v325
  %v348 = vunpack.c.l.b16 %v326
  %v349 = vunpack.c.l.b16 %v327
  %v350 = vunpack.c.l.b16 %v328
  %v351 = vunpack.c.l.b16 %v329
  %v352 = vunpack.c.l.b16 %v330
  %v353 = vpack.c.b16 %v346, %v345
  %v354 = vpack.c.b16 %v348, %v347
  %v355 = vpack.c.b16 %v350, %v349
  %v356 = vpack.c.b16 %v352, %v351
  %v362 = vsel %vm154, %v335, 0
  %v365 = vsel %vm154, %v336, 0
  %367 = vmatprep.subr.bf16.mxu0 0
  %368 = vmatpush1.bf16.msra.mxu0 %v353
  %369 = vmatprep.subr.bf16.mxu0 0
  %370 = vmatpush1.bf16.msra.mxu0 %v354
  %371 = vmatprep.subr.bf16.mxu0 0
  %372 = vmatpush1.bf16.msra.mxu0 %v355
  %373 = vmatprep.subr.bf16.mxu0 0
  %374 = vmatpush1.bf16.msra.mxu0 %v356
  %375 = vmatprep.subr.bf16.mxu0 0
  %376 = vmatpush1.bf16.msra.mxu0 0
  %377 = vmatprep.subr.bf16.mxu0 0
  %378 = vmatpush1.bf16.msra.mxu0 0
  %379 = vmatprep.subr.bf16.mxu0 0
  %380 = vmatpush1.bf16.msra.mxu0 0
  %381 = vmatprep.subr.bf16.mxu0 0
  %382 = vmatpush1.bf16.msra.mxu0 0
  %383 = vmatprep.subr.bf16.mxu0 0
  %384 = vmatpush1.bf16.msra.mxu0 0
  %385 = vmatprep.subr.bf16.mxu0 0
  %386 = vmatpush1.bf16.msra.mxu0 0
  %387 = vmatprep.subr.bf16.mxu0 0
  %388 = vmatpush1.bf16.msra.mxu0 0
  %389 = vmatprep.subr.bf16.mxu0 0
  %390 = vmatpush1.bf16.msra.mxu0 0
  %391 = vmatprep.subr.bf16.mxu0 0
  %392 = vmatpush1.bf16.msra.mxu0 0
  %393 = vmatprep.subr.bf16.mxu0 0
  %394 = vmatpush1.bf16.msra.mxu0 0
  %395 = vmatprep.subr.bf16.mxu0 0
  %396 = vmatpush1.bf16.msra.mxu0 0
  %397 = vmatprep.subr.bf16.mxu0 0
  %398 = vmatpush1.bf16.msra.mxu0 0
  %399 = vmatprep.mubr.bf16.mxu0 0
  %400 = vmatmul.mubr.bf16.gmra.mrb[0].mxu0 %v362
  %v401 = vpop.f32.mrb[0].mxu0
  %v402 = vadd.f32 0.0, %v401
  %v403 = vpop.f32.mrb[0].mxu0
  %v404 = vpop.f32.mrb[0].mxu0
  %v405 = vadd.f32 0.0, %v404
  %v406 = vpop.f32.mrb[0].mxu0
  %407 = vmatprep.mubr.bf16.mxu0 0
  %408 = vmatmul.mubr.bf16.gmra.mrb[0].mxu0 %v365
  %v409 = vpop.f32.mrb[0].mxu0
  %v410 = vadd.f32 0.0, %v409
  %v411 = vpop.f32.mrb[0].mxu0
  %v412 = vpop.f32.mrb[0].mxu0
  %v413 = vadd.f32 0.0, %v412
  %v414 = vpop.f32.mrb[0].mxu0
  %415 = vdwg.mxu0
  %v416 = vadd.f32 %v283, %v402
  %v417 = vadd.f32 %v286, %v405
  %v418 = vadd.f32 %v291, %v410
  %v419 = vadd.f32 %v294, %v413
  %v420 = vld [vmem:[%s2] sm:$0x1]
  %v422 = vlaneseq
  %v423 = vshrl.u32 %v422, 7
  %v424 = vsub.s32 0, %v423
  %v425 = vrot.slane %v420, %v424
  %v427 = vadd.f32 %v416, %v425
  %v428 = vadd.f32 %v417, %v425
  %v429 = vadd.f32 %v418, %v425
  %v430 = vadd.f32 %v419, %v425
  %v431 = vsel %vm154, %v427, 0.0
  %v432 = vsel %vm154, %v428, 0.0
  %v433 = vadd.f32 %v431, %v432
  %v434 = vrot.slane %v433, 4
  %v435 = vadd.f32 %v433, %v434
  %v436 = vrot.slane %v435, 2
  %v437 = vadd.f32 %v435, %v436
  %v438 = vrot.slane %v437, 1
  %v439 = vadd.f32 %v437, %v438
  %v440 = vsel %vm154, %v429, 0.0
  %v441 = vsel %vm154, %v430, 0.0
  %v442 = vadd.f32 %v440, %v441
  %v443 = vrot.slane %v442, 4
  %v444 = vadd.f32 %v442, %v443
  %v445 = vrot.slane %v444, 2
  %v446 = vadd.f32 %v444, %v445
  %v447 = vrot.slane %v446, 1
  %v448 = vadd.f32 %v446, %v447
  %v449 = vmul.f32 %v427, %v427
  %v450 = vmul.f32 %v428, %v428
  %v451 = vmul.f32 %v429, %v429
  %v452 = vmul.f32 %v430, %v430
  %v453 = vsel %vm154, %v449, 0.0
  %v454 = vsel %vm154, %v450, 0.0
  %v455 = vadd.f32 %v453, %v454
  %v456 = vrot.slane %v455, 4
  %v457 = vadd.f32 %v455, %v456
  %v458 = vrot.slane %v457, 2
  %v459 = vadd.f32 %v457, %v458
  %v460 = vrot.slane %v459, 1
  %v461 = vadd.f32 %v459, %v460
  %v462 = vsel %vm154, %v451, 0.0
  %v463 = vsel %vm154, %v452, 0.0
  %v464 = vadd.f32 %v462, %v463
  %v465 = vrot.slane %v464, 4
  %v466 = vadd.f32 %v464, %v465
  %v467 = vrot.slane %v466, 2
  %v468 = vadd.f32 %v466, %v467
  %v469 = vrot.slane %v468, 1
  %v470 = vadd.f32 %v468, %v469
  %vm473 = vcmask 1041409
  %v474 = vsel %vm473, %v448, %v439
  %v478 = vsel %vm473, %v470, %v461
  %479 = vrot.lane.b32.xlu0 %v478, 64
  %v480 = vpop.permute.xlu0 %479
  %v482 = vsel %vm154, %v474, %v480
  %v483 = vld [vmem:[%s5] sm:$0xff]
  %v484 = vld [vmem:[%s5 + $0x8] sm:$0xff]
  %v485 = vld [vmem:[%s5 + $0x10] sm:$0xff]
  %v486 = vld [vmem:[%s5 + $0x18] sm:$0xff]
  %v487 = vld [vmem:[%s5 + $0x20] sm:$0xff]
  %v488 = vld [vmem:[%s5 + $0x28] sm:$0xff]
  %v489 = vld [vmem:[%s5 + $0x30] sm:$0xff]
  %v490 = vld [vmem:[%s5 + $0x38] sm:$0xff]
  %v491 = vld [vmem:[%s5 + $0x40] sm:$0xff]
  %v492 = vld [vmem:[%s5 + $0x48] sm:$0xff]
  %v493 = vld [vmem:[%s5 + $0x50] sm:$0xff]
  %v494 = vld [vmem:[%s5 + $0x58] sm:$0xff]
  %v495 = vld [vmem:[%s5 + $0x60] sm:$0xff]
  %v496 = vld [vmem:[%s5 + $0x68] sm:$0xff]
  %v497 = vld [vmem:[%s5 + $0x70] sm:$0xff]
  %v498 = vld [vmem:[%s5 + $0x78] sm:$0xff]
  %499 = vmatprep.subr.mxu0 0.0
  %500 = vmatpush1.msra.mxu0 %v483
  %501 = vmatprep.subr.mxu0 0.0
  %502 = vmatpush1.msra.mxu0 %v484
  %503 = vmatprep.subr.mxu0 0.0
  %504 = vmatpush1.msra.mxu0 %v485
  %505 = vmatprep.subr.mxu0 0.0
  %506 = vmatpush1.msra.mxu0 %v486
  %507 = vmatprep.subr.mxu0 0.0
  %508 = vmatpush1.msra.mxu0 %v487
  %509 = vmatprep.subr.mxu0 0.0
  %510 = vmatpush1.msra.mxu0 %v488
  %511 = vmatprep.subr.mxu0 0.0
  %512 = vmatpush1.msra.mxu0 %v489
  %513 = vmatprep.subr.mxu0 0.0
  %514 = vmatpush1.msra.mxu0 %v490
  %515 = vmatprep.subr.mxu0 0.0
  %516 = vmatpush1.msra.mxu0 %v491
  %517 = vmatprep.subr.mxu0 0.0
  %518 = vmatpush1.msra.mxu0 %v492
  %519 = vmatprep.subr.mxu0 0.0
  %520 = vmatpush1.msra.mxu0 %v493
  %521 = vmatprep.subr.mxu0 0.0
  %522 = vmatpush1.msra.mxu0 %v494
  %523 = vmatprep.subr.mxu0 0.0
  %524 = vmatpush1.msra.mxu0 %v495
  %525 = vmatprep.subr.mxu0 0.0
  %526 = vmatpush1.msra.mxu0 %v496
  %527 = vmatprep.subr.mxu0 0.0
  %528 = vmatpush1.msra.mxu0 %v497
  %529 = vmatprep.subr.mxu0 0.0
  %530 = vmatpush1.msra.mxu0 %v498
  %531 = vmatprep.subr.mxu0 0.0
  %532 = vmatpush1.msra.mxu0 0.0
  %533 = vmatprep.subr.mxu0 0.0
  %534 = vmatpush1.msra.mxu0 0.0
  %535 = vmatprep.subr.mxu0 0.0
  %536 = vmatpush1.msra.mxu0 0.0
  %537 = vmatprep.subr.mxu0 0.0
  %538 = vmatpush1.msra.mxu0 0.0
  %539 = vmatprep.subr.mxu0 0.0
  %540 = vmatpush1.msra.mxu0 0.0
  %541 = vmatprep.subr.mxu0 0.0
  %542 = vmatpush1.msra.mxu0 0.0
  %543 = vmatprep.subr.mxu0 0.0
  %544 = vmatpush1.msra.mxu0 0.0
  %545 = vmatprep.subr.mxu0 0.0
  %546 = vmatpush1.msra.mxu0 0.0
  %547 = vmatprep.subr.mxu0 0.0
  %548 = vmatpush1.msra.mxu0 0.0
  %549 = vmatprep.subr.mxu0 0.0
  %550 = vmatpush1.msra.mxu0 0.0
  %551 = vmatprep.subr.mxu0 0.0
  %552 = vmatpush1.msra.mxu0 0.0
  %553 = vmatprep.subr.mxu0 0.0
  %554 = vmatpush1.msra.mxu0 0.0
  %555 = vmatprep.subr.mxu0 0.0
  %556 = vmatpush1.msra.mxu0 0.0
  %557 = vmatprep.subr.mxu0 0.0
  %558 = vmatpush1.msra.mxu0 0.0
  %559 = vmatprep.subr.mxu0 0.0
  %560 = vmatpush1.msra.mxu0 0.0
  %561 = vmatprep.subr.mxu0 0.0
  %562 = vmatpush1.msra.mxu0 0.0
  %563 = vmatprep.mubr.f32.mxu0 0.0
  %564 = vmatmul.mubr.f32.gmra.mrb[0].mxu0 %v482
  %v565 = vpop.f32.mrb[0].mxu0
  %v566 = vadd.f32 0.0, %v565
  %v567 = vpop.f32.mrb[0].mxu0
  %568 = vdwg.mxu0
  %v569 = vmul.f32 %v566, 0.00390625
  %v570 = vmul.f32 %v569, %v569
  %572 = vrot.lane.b32.xlu0 %v570, 4
  %v573 = vpop.permute.xlu0 %572
  %v575 = vsub.f32 %v569, %v573
  %v576 = vadd.f32 %v575, 1e-05
  %v577 = vrsqrt.pop %v576
  %vm578 = vcmask 31744
  %v579 = vsel %vm578, %v569, %v577
  %v580 = vld [vmem:[%s6] sm:$0xff]
  %vm581 = vcmask 64512
  %v583 = vsel %vm581, %v579, 0
  %585 = vmatprep.subr.mxu0 0.0
  %586 = vmatpush1.msra.mxu0 %v580
  %587 = vmatprep.subr.mxu0 0.0
  %588 = vmatpush1.msra.mxu0 0.0
  %589 = vmatprep.subr.mxu0 0.0
  %590 = vmatpush1.msra.mxu0 0.0
  %591 = vmatprep.subr.mxu0 0.0
  %592 = vmatpush1.msra.mxu0 0.0
  %593 = vmatprep.subr.mxu0 0.0
  %594 = vmatpush1.msra.mxu0 0.0
  %595 = vmatprep.subr.mxu0 0.0
  %596 = vmatpush1.msra.mxu0 0.0
  %597 = vmatprep.subr.mxu0 0.0
  %598 = vmatpush1.msra.mxu0 0.0
  %599 = vmatprep.subr.mxu0 0.0
  %600 = vmatpush1.msra.mxu0 0.0
  %601 = vmatprep.subr.mxu0 0.0
  %602 = vmatpush1.msra.mxu0 0.0
  %603 = vmatprep.subr.mxu0 0.0
  %604 = vmatpush1.msra.mxu0 0.0
  %605 = vmatprep.subr.mxu0 0.0
  %606 = vmatpush1.msra.mxu0 0.0
  %607 = vmatprep.subr.mxu0 0.0
  %608 = vmatpush1.msra.mxu0 0.0
  %609 = vmatprep.subr.mxu0 0.0
  %610 = vmatpush1.msra.mxu0 0.0
  %611 = vmatprep.subr.mxu0 0.0
  %612 = vmatpush1.msra.mxu0 0.0
  %613 = vmatprep.subr.mxu0 0.0
  %614 = vmatpush1.msra.mxu0 0.0
  %615 = vmatprep.subr.mxu0 0.0
  %616 = vmatpush1.msra.mxu0 0.0
  %617 = vmatprep.subr.mxu0 0.0
  %618 = vmatpush1.msra.mxu0 0.0
  %619 = vmatprep.subr.mxu0 0.0
  %620 = vmatpush1.msra.mxu0 0.0
  %621 = vmatprep.subr.mxu0 0.0
  %622 = vmatpush1.msra.mxu0 0.0
  %623 = vmatprep.subr.mxu0 0.0
  %624 = vmatpush1.msra.mxu0 0.0
  %625 = vmatprep.subr.mxu0 0.0
  %626 = vmatpush1.msra.mxu0 0.0
  %627 = vmatprep.subr.mxu0 0.0
  %628 = vmatpush1.msra.mxu0 0.0
  %629 = vmatprep.subr.mxu0 0.0
  %630 = vmatpush1.msra.mxu0 0.0
  %631 = vmatprep.subr.mxu0 0.0
  %632 = vmatpush1.msra.mxu0 0.0
  %633 = vmatprep.subr.mxu0 0.0
  %634 = vmatpush1.msra.mxu0 0.0
  %635 = vmatprep.subr.mxu0 0.0
  %636 = vmatpush1.msra.mxu0 0.0
  %637 = vmatprep.subr.mxu0 0.0
  %638 = vmatpush1.msra.mxu0 0.0
  %639 = vmatprep.subr.mxu0 0.0
  %640 = vmatpush1.msra.mxu0 0.0
  %641 = vmatprep.subr.mxu0 0.0
  %642 = vmatpush1.msra.mxu0 0.0
  %643 = vmatprep.subr.mxu0 0.0
  %644 = vmatpush1.msra.mxu0 0.0
  %645 = vmatprep.subr.mxu0 0.0
  %646 = vmatpush1.msra.mxu0 0.0
  %647 = vmatprep.subr.mxu0 0.0
  %648 = vmatpush1.msra.mxu0 0.0
  %649 = vmatprep.mubr.f32.mxu0 0.0
  %650 = vmatmul.mubr.f32.gmra.mrb[0].mxu0 %v583
  %v651 = vpop.f32.mrb[0].mxu0
  %v652 = vadd.f32 0.0, %v651
  %v653 = vpop.f32.mrb[0].mxu0
  %654 = vdwg.mxu0
  %v657 = vunpack.c.l.s4 1966171168
  %v658 = vunpack.c.0.s8 %v657
  %v659 = vlaneseq
  %v660 = vshrl.u32 %v659, 7
  %v661 = vsub.s32 %v658, %v660
  %v662 = vrot.slane %v652, %v661
  %v663 = vcombine.high %v662, %v662
  %v665 = vunpack.c.l.s4 1966171168
  %v666 = vunpack.c.0.s8 %v665
  %v667 = vlaneseq
  %v668 = vshrl.u32 %v667, 7
  %v669 = vsub.s32 %v666, %v668
  %v670 = vrot.slane %v662, %v669
  %v672 = vunpack.c.l.s4 1966171168
  %v673 = vunpack.c.0.s8 %v672
  %v674 = vlaneseq
  %v675 = vshrl.u32 %v674, 7
  %v676 = vsub.s32 %v673, %v675
  %v677 = vrot.slane %v663, %v676
  %v678 = vlaneseq
  %v679 = vshrl.u32 %v678, 7
  %v680 = vsub.s32 0, %v679
  %v681 = vrot.slane %v670, %v680
  %v682 = vlaneseq
  %v683 = vshrl.u32 %v682, 7
  %v684 = vsub.s32 0, %v683
  %v685 = vrot.slane %v677, %v684
  %v688 = vsub.f32 %v427, %v681
  %v689 = vsub.f32 %v428, %v681
  %v690 = vsub.f32 %v429, %v685
  %v691 = vsub.f32 %v430, %v685
  %692 = vrot.lane.b32.xlu0 %v681, 64
  %v693 = vpop.permute.xlu0 %692
  %694 = vrot.lane.b32.xlu0 %v685, 64
  %v695 = vpop.permute.xlu0 %694
  %v698 = vmul.f32 %v688, %v693
  %v699 = vmul.f32 %v689, %v693
  %v700 = vmul.f32 %v690, %v695
  %v701 = vmul.f32 %v691, %v695
  %vm702 = vcmp.ge.f32.partialorder %v698, 0.0
  %vm703 = vcmp.ge.f32.partialorder %v699, 0.0
  %vm704 = vcmp.ge.f32.partialorder %v700, 0.0
  %vm705 = vcmp.ge.f32.partialorder %v701, 0.0
  %v706 = vmul.f32 %v698, 0.2
  %v707 = vmul.f32 %v699, 0.2
  %v708 = vmul.f32 %v700, 0.2
  %v709 = vmul.f32 %v701, 0.2
  %v710 = vsel %vm702, %v698, %v706
  %v711 = vsel %vm703, %v699, %v707
  %v712 = vsel %vm704, %v700, %v708
  %v713 = vsel %vm705, %v701, %v709
  %vm714 = vcmask 516096
  %vm715 = vsmask.f32 256
  %vm716 = vmand %vm714, %vm715
  %v717 = vld [vmem:[#allocation3] sm:$0x1]
  %v718 = vsel %vm716, 0, %v717
  %719 = vst [vmem:[#allocation3] sm:$0x1] %v718
  %v720 = vld [vmem:[#allocation3 + $0xc] sm:$0x1]
  %v721 = vsel %vm716, 0, %v720
  %722 = vst [vmem:[#allocation3 + $0xc] sm:$0x1] %v721
  %vm723 = vsmask.f32 7938
  %vm724 = vmand %vm714, %vm723
  %v725 = vld [vmem:[#allocation3 + $0x8] sm:$0x1]
  %v726 = vsel %vm724, 0, %v725
  %727 = vst [vmem:[#allocation3 + $0x8] sm:$0x1] %v726
  %v728 = vld [vmem:[#allocation3 + $0x14] sm:$0x1]
  %v729 = vsel %vm724, 0, %v728
  %730 = vst [vmem:[#allocation3 + $0x14] sm:$0x1] %v729
  %v731 = vpack.c.bf16 %v711, %v710
  %v732 = vpack.c.bf16 %v713, %v712
  %v735 = vunpack.c.l.b16 %v731
  %v736 = vunpack.c.h.b16 %v731
  %v737 = vunpack.c.l.b16 %v732
  %v738 = vunpack.c.h.b16 %v732
  %v739 = vpack.c.b16 %v735, %v735
  %v740 = vpack.c.b16 %v736, %v736
  %v741 = vpack.c.b16 %v737, %v737
  %v742 = vpack.c.b16 %v738, %v738
  %vm743 = vsmask.f32 4368
  %vm744 = vmor %vm715, %vm743
  %v746 = vshrl.u32 %v739, 16
  %v748 = vrot.slane %v746, 7
  %v749 = vshll.u32 %v739, 16
  %v751 = vor.u32 %v748, %v749
  %v752 = vrot.slane %v748, 4
  %v754 = vshrl.u32 %v740, 16
  %v756 = vrot.slane %v754, 7
  %v757 = vshll.u32 %v740, 16
  %v759 = vor.u32 %v756, %v757
  %v760 = vsel %vm744, %v752, %v759
  %v761 = vrot.slane %v756, 4
  %v763 = vshrl.u32 %v741, 16
  %v765 = vrot.slane %v763, 7
  %v766 = vshll.u32 %v741, 16
  %v768 = vor.u32 %v765, %v766
  %v769 = vrot.slane %v765, 4
  %v771 = vshrl.u32 %v742, 16
  %v773 = vrot.slane %v771, 7
  %v774 = vshll.u32 %v742, 16
  %v776 = vor.u32 %v773, %v774
  %v777 = vsel %vm744, %v769, %v776
  %v778 = vrot.slane %v773, 4
  %vm785 = vcmask 519168
  %vm786 = vmand %vm785, %vm723
  %v787 = vld [vmem:[#allocation3] sm:$0xf]
  %v788 = vsel %vm786, %v751, %v787
  %789 = vst [vmem:[#allocation3] sm:$0xf] %v788
  %790 = vst.msk [vmem:[#allocation3 + $0x4] sm:$0xf] %vm70, %v760
  %v791 = vld [vmem:[#allocation3 + $0x8] sm:$0x1]
  %v792 = vsel %vm716, %v761, %v791
  %793 = vst [vmem:[#allocation3 + $0x8] sm:$0x1] %v792
  %v794 = vld [vmem:[#allocation3 + $0xc] sm:$0xf]
  %v795 = vsel %vm786, %v768, %v794
  %796 = vst [vmem:[#allocation3 + $0xc] sm:$0xf] %v795
  %797 = vst.msk [vmem:[#allocation3 + $0x10] sm:$0xf] %vm70, %v777
  %v798 = vld [vmem:[#allocation3 + $0x14] sm:$0x1]
  %v799 = vsel %vm716, %v778, %v798
  %800 = vst [vmem:[#allocation3 + $0x14] sm:$0x1] %v799
  %v801 = vld [vmem:[#allocation3] sm:$0xf]
  %v802 = vld [vmem:[#allocation3 + $0x4] sm:$0xf]
  %v803 = vld [vmem:[#allocation3 + $0xc] sm:$0xf]
  %v804 = vld [vmem:[#allocation3 + $0x10] sm:$0xf]
  %v805 = vld [vmem:[%s3] sm:$0xf]
  %v806 = vld [vmem:[%s3 + $0x4] sm:$0xf]
  %v807 = vld [vmem:[%s3 + $0x8] sm:$0xf]
  %v808 = vld [vmem:[%s3 + $0xc] sm:$0xf]
  %v809 = vld [vmem:[%s3 + $0x10] sm:$0xf]
  %v810 = vld [vmem:[%s3 + $0x14] sm:$0xf]
  %v811 = vld [vmem:[%s3 + $0x18] sm:$0xf]
  %v812 = vld [vmem:[%s3 + $0x1c] sm:$0xf]
  %v813 = vld [vmem:[#allocation3 + $0x8] sm:$0x1]
  %v814 = vld [vmem:[#allocation3 + $0x14] sm:$0x1]
  %vm815 = vsmask.f32 3328
  %vm816 = vsmask.f32 7440
  %vm817 = vmor %vm815, %vm816
  %v819 = vshrl.u32 %v801, 16
  %v821 = vrot.slane %v819, 4
  %v822 = vshll.u32 %v801, 16
  %v824 = vrot.slane %v822, 5
  %v825 = vor.u32 %v821, %v824
  %v826 = vrot.slane %v825, 4
  %v828 = vshll.u32 %v802, 16
  %v830 = vrot.slane %v828, 5
  %v831 = vsel %vm817, %v826, %v830
  %v832 = vshrl.u32 %v802, 16
  %v834 = vrot.slane %v832, 4
  %v835 = vor.u32 %v834, %v830
  %v836 = vrot.slane %v835, 4
  %v838 = vshll.u32 %v813, 16
  %v840 = vrot.slane %v838, 5
  %v841 = vsel %vm817, %v836, %v840
  %v843 = vshrl.u32 %v803, 16
  %v845 = vrot.slane %v843, 4
  %v846 = vshll.u32 %v803, 16
  %v848 = vrot.slane %v846, 5
  %v849 = vor.u32 %v845, %v848
  %v850 = vrot.slane %v849, 4
  %v852 = vshll.u32 %v804, 16
  %v854 = vrot.slane %v852, 5
  %v855 = vsel %vm817, %v850, %v854
  %v856 = vshrl.u32 %v804, 16
  %v858 = vrot.slane %v856, 4
  %v859 = vor.u32 %v858, %v854
  %v860 = vrot.slane %v859, 4
  %v862 = vshll.u32 %v814, 16
  %v864 = vrot.slane %v862, 5
  %v865 = vsel %vm817, %v860, %v864
  %s866 = scalar_lea.vmem %s3, 32
  %v867 = vld [vmem:[%s866] sm:$0xf]
  %v868 = vld [vmem:[%s866 + $0x4] sm:$0xf]
  %v869 = vld [vmem:[%s866 + $0x8] sm:$0xf]
  %v870 = vld [vmem:[%s866 + $0xc] sm:$0xf]
  %v871 = vld [vmem:[%s866 + $0x10] sm:$0xf]
  %v872 = vld [vmem:[%s866 + $0x14] sm:$0xf]
  %v873 = vld [vmem:[%s866 + $0x18] sm:$0xf]
  %v874 = vld [vmem:[%s866 + $0x1c] sm:$0xf]
  %v875 = vunpack.c.l.b16 %v831
  %v876 = vunpack.c.l.b16 %v841
  %v877 = vunpack.c.l.b16 %v855
  %v878 = vunpack.c.l.b16 %v865
  %v879 = vpack.c.b16 %v876, %v875
  %v880 = vpack.c.b16 %v878, %v877
  %v889 = vunpack.c.l.b16 %v867
  %v890 = vunpack.c.l.b16 %v868
  %v891 = vunpack.c.l.b16 %v869
  %v892 = vunpack.c.l.b16 %v870
  %v893 = vunpack.c.l.b16 %v871
  %v894 = vunpack.c.l.b16 %v872
  %v895 = vunpack.c.l.b16 %v873
  %v896 = vunpack.c.l.b16 %v874
  %v897 = vpack.c.b16 %v890, %v889
  %v898 = vpack.c.b16 %v892, %v891
  %v899 = vpack.c.b16 %v894, %v893
  %v900 = vpack.c.b16 %v896, %v895
  %v906 = vsel %vm154, %v879, 0
  %v909 = vsel %vm154, %v880, 0
  %911 = vmatprep.subr.bf16.mxu0 0
  %912 = vmatpush1.bf16.msra.mxu0 %v897
  %913 = vmatprep.subr.bf16.mxu0 0
  %914 = vmatpush1.bf16.msra.mxu0 %v898
  %915 = vmatprep.subr.bf16.mxu0 0
  %916 = vmatpush1.bf16.msra.mxu0 %v899
  %917 = vmatprep.subr.bf16.mxu0 0
  %918 = vmatpush1.bf16.msra.mxu0 %v900
  %919 = vmatprep.subr.bf16.mxu0 0
  %920 = vmatpush1.bf16.msra.mxu0 0
  %921 = vmatprep.subr.bf16.mxu0 0
  %922 = vmatpush1.bf16.msra.mxu0 0
  %923 = vmatprep.subr.bf16.mxu0 0
  %924 = vmatpush1.bf16.msra.mxu0 0
  %925 = vmatprep.subr.bf16.mxu0 0
  %926 = vmatpush1.bf16.msra.mxu0 0
  %927 = vmatprep.subr.bf16.mxu0 0
  %928 = vmatpush1.bf16.msra.mxu0 0
  %929 = vmatprep.subr.bf16.mxu0 0
  %930 = vmatpush1.bf16.msra.mxu0 0
  %931 = vmatprep.subr.bf16.mxu0 0
  %932 = vmatpush1.bf16.msra.mxu0 0
  %933 = vmatprep.subr.bf16.mxu0 0
  %934 = vmatpush1.bf16.msra.mxu0 0
  %935 = vmatprep.subr.bf16.mxu0 0
  %936 = vmatpush1.bf16.msra.mxu0 0
  %937 = vmatprep.subr.bf16.mxu0 0
  %938 = vmatpush1.bf16.msra.mxu0 0
  %939 = vmatprep.subr.bf16.mxu0 0
  %940 = vmatpush1.bf16.msra.mxu0 0
  %941 = vmatprep.subr.bf16.mxu0 0
  %942 = vmatpush1.bf16.msra.mxu0 0
  %943 = vmatprep.mubr.bf16.mxu0 0
  %944 = vmatmul.mubr.bf16.gmra.mrb[0].mxu0 %v906
  %v945 = vpop.f32.mrb[0].mxu0
  %v946 = vadd.f32 0.0, %v945
  %v947 = vpop.f32.mrb[0].mxu0
  %v948 = vpop.f32.mrb[0].mxu0
  %v949 = vadd.f32 0.0, %v948
  %v950 = vpop.f32.mrb[0].mxu0
  %951 = vmatprep.mubr.bf16.mxu0 0
  %952 = vmatmul.mubr.bf16.gmra.mrb[0].mxu0 %v909
  %v953 = vpop.f32.mrb[0].mxu0
  %v954 = vadd.f32 0.0, %v953
  %v955 = vpop.f32.mrb[0].mxu0
  %v956 = vpop.f32.mrb[0].mxu0
  %v957 = vadd.f32 0.0, %v956
  %v958 = vpop.f32.mrb[0].mxu0
  %959 = vdwg.mxu0
  %v964 = vunpack.c.l.b16 %v801
  %v965 = vunpack.c.l.b16 %v802
  %v966 = vunpack.c.l.b16 %v803
  %v967 = vunpack.c.l.b16 %v804
  %v968 = vpack.c.b16 %v965, %v964
  %v969 = vpack.c.b16 %v967, %v966
  %v978 = vunpack.c.l.b16 %v805
  %v979 = vunpack.c.l.b16 %v806
  %v980 = vunpack.c.l.b16 %v807
  %v981 = vunpack.c.l.b16 %v808
  %v982 = vunpack.c.l.b16 %v809
  %v983 = vunpack.c.l.b16 %v810
  %v984 = vunpack.c.l.b16 %v811
  %v985 = vunpack.c.l.b16 %v812
  %v986 = vpack.c.b16 %v979, %v978
  %v987 = vpack.c.b16 %v981, %v980
  %v988 = vpack.c.b16 %v983, %v982
  %v989 = vpack.c.b16 %v985, %v984
  %v995 = vsel %vm154, %v968, 0
  %v998 = vsel %vm154, %v969, 0
  %1000 = vmatprep.subr.bf16.mxu0 0
  %1001 = vmatpush1.bf16.msra.mxu0 %v986
  %1002 = vmatprep.subr.bf16.mxu0 0
  %1003 = vmatpush1.bf16.msra.mxu0 %v987
  %1004 = vmatprep.subr.bf16.mxu0 0
  %1005 = vmatpush1.bf16.msra.mxu0 %v988
  %1006 = vmatprep.subr.bf16.mxu0 0
  %1007 = vmatpush1.bf16.msra.mxu0 %v989
  %1008 = vmatprep.subr.bf16.mxu0 0
  %1009 = vmatpush1.bf16.msra.mxu0 0
  %1010 = vmatprep.subr.bf16.mxu0 0
  %1011 = vmatpush1.bf16.msra.mxu0 0
  %1012 = vmatprep.subr.bf16.mxu0 0
  %1013 = vmatpush1.bf16.msra.mxu0 0
  %1014 = vmatprep.subr.bf16.mxu0 0
  %1015 = vmatpush1.bf16.msra.mxu0 0
  %1016 = vmatprep.subr.bf16.mxu0 0
  %1017 = vmatpush1.bf16.msra.mxu0 0
  %1018 = vmatprep.subr.bf16.mxu0 0
  %1019 = vmatpush1.bf16.msra.mxu0 0
  %1020 = vmatprep.subr.bf16.mxu0 0
  %1021 = vmatpush1.bf16.msra.mxu0 0
  %1022 = vmatprep.subr.bf16.mxu0 0
  %1023 = vmatpush1.bf16.msra.mxu0 0
  %1024 = vmatprep.subr.bf16.mxu0 0
  %1025 = vmatpush1.bf16.msra.mxu0 0
  %1026 = vmatprep.subr.bf16.mxu0 0
  %1027 = vmatpush1.bf16.msra.mxu0 0
  %1028 = vmatprep.subr.bf16.mxu0 0
  %1029 = vmatpush1.bf16.msra.mxu0 0
  %1030 = vmatprep.subr.bf16.mxu0 0
  %1031 = vmatpush1.bf16.msra.mxu0 0
  %1032 = vmatprep.mubr.bf16.mxu0 0
  %1033 = vmatmul.mubr.bf16.gmra.mrb[0].mxu0 %v995
  %v1034 = vpop.f32.mrb[0].mxu0
  %v1035 = vadd.f32 %v946, %v1034
  %v1036 = vpop.f32.mrb[0].mxu0
  %v1037 = vpop.f32.mrb[0].mxu0
  %v1038 = vadd.f32 %v949, %v1037
  %v1039 = vpop.f32.mrb[0].mxu0
  %1040 = vmatprep.mubr.bf16.mxu0 0
  %1041 = vmatmul.mubr.bf16.gmra.mrb[0].mxu0 %v998
  %v1042 = vpop.f32.mrb[0].mxu0
  %v1043 = vadd.f32 %v954, %v1042
  %v1044 = vpop.f32.mrb[0].mxu0
  %v1045 = vpop.f32.mrb[0].mxu0
  %v1046 = vadd.f32 %v957, %v1045
  %v1047 = vpop.f32.mrb[0].mxu0
  %1048 = vdwg.mxu0
  %v1049 = vld [vmem:[#allocation3] sm:$0xe]
  %v1050 = vld [vmem:[#allocation3 + $0xc] sm:$0xe]
  %v1055 = vrot.slane %v1049, 5
  %v1056 = vrot.slane %v1055, 4
  %v1057 = vrot.slane %v802, 5
  %v1058 = vsel %vm100, %v1056, %v1057
  %v1059 = vrot.slane %v1057, 4
  %v1060 = vrot.slane %v813, 5
  %v1061 = vsel %vm100, %v1059, %v1060
  %v1062 = vrot.slane %v1050, 5
  %v1063 = vrot.slane %v1062, 4
  %v1064 = vrot.slane %v804, 5
  %v1065 = vsel %vm100, %v1063, %v1064
  %v1066 = vrot.slane %v1064, 4
  %v1067 = vrot.slane %v814, 5
  %v1068 = vsel %vm100, %v1066, %v1067
  %s1069 = scalar_lea.vmem %s3, 64
  %v1070 = vld [vmem:[%s1069] sm:$0xf]
  %v1071 = vld [vmem:[%s1069 + $0x4] sm:$0xf]
  %v1072 = vld [vmem:[%s1069 + $0x8] sm:$0xf]
  %v1073 = vld [vmem:[%s1069 + $0xc] sm:$0xf]
  %v1074 = vld [vmem:[%s1069 + $0x10] sm:$0xf]
  %v1075 = vld [vmem:[%s1069 + $0x14] sm:$0xf]
  %v1076 = vld [vmem:[%s1069 + $0x18] sm:$0xf]
  %v1077 = vld [vmem:[%s1069 + $0x1c] sm:$0xf]
  %v1078 = vunpack.c.l.b16 %v1058
  %v1079 = vunpack.c.l.b16 %v1061
  %v1080 = vunpack.c.l.b16 %v1065
  %v1081 = vunpack.c.l.b16 %v1068
  %v1082 = vpack.c.b16 %v1079, %v1078
  %v1083 = vpack.c.b16 %v1081, %v1080
  %v1092 = vunpack.c.l.b16 %v1070
  %v1093 = vunpack.c.l.b16 %v1071
  %v1094 = vunpack.c.l.b16 %v1072
  %v1095 = vunpack.c.l.b16 %v1073
  %v1096 = vunpack.c.l.b16 %v1074
  %v1097 = vunpack.c.l.b16 %v1075
  %v1098 = vunpack.c.l.b16 %v1076
  %v1099 = vunpack.c.l.b16 %v1077
  %v1100 = vpack.c.b16 %v1093, %v1092
  %v1101 = vpack.c.b16 %v1095, %v1094
  %v1102 = vpack.c.b16 %v1097, %v1096
  %v1103 = vpack.c.b16 %v1099, %v1098
  %v1109 = vsel %vm154, %v1082, 0
  %v1112 = vsel %vm154, %v1083, 0
  %1114 = vmatprep.subr.bf16.mxu0 0
  %1115 = vmatpush1.bf16.msra.mxu0 %v1100
  %1116 = vmatprep.subr.bf16.mxu0 0
  %1117 = vmatpush1.bf16.msra.mxu0 %v1101
  %1118 = vmatprep.subr.bf16.mxu0 0
  %1119 = vmatpush1.bf16.msra.mxu0 %v1102
  %1120 = vmatprep.subr.bf16.mxu0 0
  %1121 = vmatpush1.bf16.msra.mxu0 %v1103
  %1122 = vmatprep.subr.bf16.mxu0 0
  %1123 = vmatpush1.bf16.msra.mxu0 0
  %1124 = vmatprep.subr.bf16.mxu0 0
  %1125 = vmatpush1.bf16.msra.mxu0 0
  %1126 = vmatprep.subr.bf16.mxu0 0
  %1127 = vmatpush1.bf16.msra.mxu0 0
  %1128 = vmatprep.subr.bf16.mxu0 0
  %1129 = vmatpush1.bf16.msra.mxu0 0
  %1130 = vmatprep.subr.bf16.mxu0 0
  %1131 = vmatpush1.bf16.msra.mxu0 0
  %1132 = vmatprep.subr.bf16.mxu0 0
  %1133 = vmatpush1.bf16.msra.mxu0 0
  %1134 = vmatprep.subr.bf16.mxu0 0
  %1135 = vmatpush1.bf16.msra.mxu0 0
  %1136 = vmatprep.subr.bf16.mxu0 0
  %1137 = vmatpush1.bf16.msra.mxu0 0
  %1138 = vmatprep.subr.bf16.mxu0 0
  %1139 = vmatpush1.bf16.msra.mxu0 0
  %1140 = vmatprep.subr.bf16.mxu0 0
  %1141 = vmatpush1.bf16.msra.mxu0 0
  %1142 = vmatprep.subr.bf16.mxu0 0
  %1143 = vmatpush1.bf16.msra.mxu0 0
  %1144 = vmatprep.subr.bf16.mxu0 0
  %1145 = vmatpush1.bf16.msra.mxu0 0
  %1146 = vmatprep.mubr.bf16.mxu0 0
  %1147 = vmatmul.mubr.bf16.gmra.mrb[0].mxu0 %v1109
  %v1148 = vpop.f32.mrb[0].mxu0
  %v1149 = vadd.f32 0.0, %v1148
  %v1150 = vpop.f32.mrb[0].mxu0
  %v1151 = vpop.f32.mrb[0].mxu0
  %v1152 = vadd.f32 0.0, %v1151
  %v1153 = vpop.f32.mrb[0].mxu0
  %1154 = vmatprep.mubr.bf16.mxu0 0
  %1155 = vmatmul.mubr.bf16.gmra.mrb[0].mxu0 %v1112
  %v1156 = vpop.f32.mrb[0].mxu0
  %v1157 = vadd.f32 0.0, %v1156
  %v1158 = vpop.f32.mrb[0].mxu0
  %v1159 = vpop.f32.mrb[0].mxu0
  %v1160 = vadd.f32 0.0, %v1159
  %v1161 = vpop.f32.mrb[0].mxu0
  %1162 = vdwg.mxu0
  %v1163 = vadd.f32 %v1035, %v1149
  %v1164 = vadd.f32 %v1038, %v1152
  %v1165 = vadd.f32 %v1043, %v1157
  %v1166 = vadd.f32 %v1046, %v1160
  %v1167 = vld [vmem:[%s4] sm:$0x1]
  %v1169 = vlaneseq
  %v1170 = vshrl.u32 %v1169, 7
  %v1171 = vsub.s32 0, %v1170
  %v1172 = vrot.slane %v1167, %v1171
  %v1174 = vadd.f32 %v1163, %v1172
  %v1175 = vadd.f32 %v1164, %v1172
  %v1176 = vadd.f32 %v1165, %v1172
  %v1177 = vadd.f32 %v1166, %v1172
  %v1178 = vsel %vm154, %v1174, 0.0
  %v1179 = vsel %vm154, %v1175, 0.0
  %v1180 = vadd.f32 %v1178, %v1179
  %v1181 = vrot.slane %v1180, 4
  %v1182 = vadd.f32 %v1180, %v1181
  %v1183 = vrot.slane %v1182, 2
  %v1184 = vadd.f32 %v1182, %v1183
  %v1185 = vrot.slane %v1184, 1
  %v1186 = vadd.f32 %v1184, %v1185
  %v1187 = vsel %vm154, %v1176, 0.0
  %v1188 = vsel %vm154, %v1177, 0.0
  %v1189 = vadd.f32 %v1187, %v1188
  %v1190 = vrot.slane %v1189, 4
  %v1191 = vadd.f32 %v1189, %v1190
  %v1192 = vrot.slane %v1191, 2
  %v1193 = vadd.f32 %v1191, %v1192
  %v1194 = vrot.slane %v1193, 1
  %v1195 = vadd.f32 %v1193, %v1194
  %v1196 = vmul.f32 %v1174, %v1174
  %v1197 = vmul.f32 %v1175, %v1175
  %v1198 = vmul.f32 %v1176, %v1176
  %v1199 = vmul.f32 %v1177, %v1177
  %v1200 = vsel %vm154, %v1196, 0.0
  %v1201 = vsel %vm154, %v1197, 0.0
  %v1202 = vadd.f32 %v1200, %v1201
  %v1203 = vrot.slane %v1202, 4
  %v1204 = vadd.f32 %v1202, %v1203
  %v1205 = vrot.slane %v1204, 2
  %v1206 = vadd.f32 %v1204, %v1205
  %v1207 = vrot.slane %v1206, 1
  %v1208 = vadd.f32 %v1206, %v1207
  %v1209 = vsel %vm154, %v1198, 0.0
  %v1210 = vsel %vm154, %v1199, 0.0
  %v1211 = vadd.f32 %v1209, %v1210
  %v1212 = vrot.slane %v1211, 4
  %v1213 = vadd.f32 %v1211, %v1212
  %v1214 = vrot.slane %v1213, 2
  %v1215 = vadd.f32 %v1213, %v1214
  %v1216 = vrot.slane %v1215, 1
  %v1217 = vadd.f32 %v1215, %v1216
  %v1220 = vsel %vm473, %v1195, %v1186
  %v1224 = vsel %vm473, %v1217, %v1208
  %1225 = vrot.lane.b32.xlu0 %v1224, 64
  %v1226 = vpop.permute.xlu0 %1225
  %v1228 = vsel %vm154, %v1220, %v1226
  %v1229 = vld [vmem:[%s5] sm:$0xff]
  %v1230 = vld [vmem:[%s5 + $0x8] sm:$0xff]
  %v1231 = vld [vmem:[%s5 + $0x10] sm:$0xff]
  %v1232 = vld [vmem:[%s5 + $0x18] sm:$0xff]
  %v1233 = vld [vmem:[%s5 + $0x20] sm:$0xff]
  %v1234 = vld [vmem:[%s5 + $0x28] sm:$0xff]
  %v1235 = vld [vmem:[%s5 + $0x30] sm:$0xff]
  %v1236 = vld [vmem:[%s5 + $0x38] sm:$0xff]
  %v1237 = vld [vmem:[%s5 + $0x40] sm:$0xff]
  %v1238 = vld [vmem:[%s5 + $0x48] sm:$0xff]
  %v1239 = vld [vmem:[%s5 + $0x50] sm:$0xff]
  %v1240 = vld [vmem:[%s5 + $0x58] sm:$0xff]
  %v1241 = vld [vmem:[%s5 + $0x60] sm:$0xff]
  %v1242 = vld [vmem:[%s5 + $0x68] sm:$0xff]
  %v1243 = vld [vmem:[%s5 + $0x70] sm:$0xff]
  %v1244 = vld [vmem:[%s5 + $0x78] sm:$0xff]
  %1245 = vmatprep.subr.mxu0 0.0
  %1246 = vmatpush1.msra.mxu0 %v1229
  %1247 = vmatprep.subr.mxu0 0.0
  %1248 = vmatpush1.msra.mxu0 %v1230
  %1249 = vmatprep.subr.mxu0 0.0
  %1250 = vmatpush1.msra.mxu0 %v1231
  %1251 = vmatprep.subr.mxu0 0.0
  %1252 = vmatpush1.msra.mxu0 %v1232
  %1253 = vmatprep.subr.mxu0 0.0
  %1254 = vmatpush1.msra.mxu0 %v1233
  %1255 = vmatprep.subr.mxu0 0.0
  %1256 = vmatpush1.msra.mxu0 %v1234
  %1257 = vmatprep.subr.mxu0 0.0
  %1258 = vmatpush1.msra.mxu0 %v1235
  %1259 = vmatprep.subr.mxu0 0.0
  %1260 = vmatpush1.msra.mxu0 %v1236
  %1261 = vmatprep.subr.mxu0 0.0
  %1262 = vmatpush1.msra.mxu0 %v1237
  %1263 = vmatprep.subr.mxu0 0.0
  %1264 = vmatpush1.msra.mxu0 %v1238
  %1265 = vmatprep.subr.mxu0 0.0
  %1266 = vmatpush1.msra.mxu0 %v1239
  %1267 = vmatprep.subr.mxu0 0.0
  %1268 = vmatpush1.msra.mxu0 %v1240
  %1269 = vmatprep.subr.mxu0 0.0
  %1270 = vmatpush1.msra.mxu0 %v1241
  %1271 = vmatprep.subr.mxu0 0.0
  %1272 = vmatpush1.msra.mxu0 %v1242
  %1273 = vmatprep.subr.mxu0 0.0
  %1274 = vmatpush1.msra.mxu0 %v1243
  %1275 = vmatprep.subr.mxu0 0.0
  %1276 = vmatpush1.msra.mxu0 %v1244
  %1277 = vmatprep.subr.mxu0 0.0
  %1278 = vmatpush1.msra.mxu0 0.0
  %1279 = vmatprep.subr.mxu0 0.0
  %1280 = vmatpush1.msra.mxu0 0.0
  %1281 = vmatprep.subr.mxu0 0.0
  %1282 = vmatpush1.msra.mxu0 0.0
  %1283 = vmatprep.subr.mxu0 0.0
  %1284 = vmatpush1.msra.mxu0 0.0
  %1285 = vmatprep.subr.mxu0 0.0
  %1286 = vmatpush1.msra.mxu0 0.0
  %1287 = vmatprep.subr.mxu0 0.0
  %1288 = vmatpush1.msra.mxu0 0.0
  %1289 = vmatprep.subr.mxu0 0.0
  %1290 = vmatpush1.msra.mxu0 0.0
  %1291 = vmatprep.subr.mxu0 0.0
  %1292 = vmatpush1.msra.mxu0 0.0
  %1293 = vmatprep.subr.mxu0 0.0
  %1294 = vmatpush1.msra.mxu0 0.0
  %1295 = vmatprep.subr.mxu0 0.0
  %1296 = vmatpush1.msra.mxu0 0.0
  %1297 = vmatprep.subr.mxu0 0.0
  %1298 = vmatpush1.msra.mxu0 0.0
  %1299 = vmatprep.subr.mxu0 0.0
  %1300 = vmatpush1.msra.mxu0 0.0
  %1301 = vmatprep.subr.mxu0 0.0
  %1302 = vmatpush1.msra.mxu0 0.0
  %1303 = vmatprep.subr.mxu0 0.0
  %1304 = vmatpush1.msra.mxu0 0.0
  %1305 = vmatprep.subr.mxu0 0.0
  %1306 = vmatpush1.msra.mxu0 0.0
  %1307 = vmatprep.subr.mxu0 0.0
  %1308 = vmatpush1.msra.mxu0 0.0
  %1309 = vmatprep.mubr.f32.mxu0 0.0
  %1310 = vmatmul.mubr.f32.gmra.mrb[0].mxu0 %v1228
  %v1311 = vpop.f32.mrb[0].mxu0
  %v1312 = vadd.f32 0.0, %v1311
  %v1313 = vpop.f32.mrb[0].mxu0
  %1314 = vdwg.mxu0
  %v1315 = vmul.f32 %v1312, 0.00390625
  %v1316 = vmul.f32 %v1315, %v1315
  %1318 = vrot.lane.b32.xlu0 %v1316, 4
  %v1319 = vpop.permute.xlu0 %1318
  %v1321 = vsub.f32 %v1315, %v1319
  %v1322 = vadd.f32 %v1321, 1e-05
  %v1323 = vrsqrt.pop %v1322
  %v1324 = vsel %vm578, %v1315, %v1323
  %v1325 = vld [vmem:[%s6] sm:$0xff]
  %v1327 = vsel %vm581, %v1324, 0
  %1329 = vmatprep.subr.mxu0 0.0
  %1330 = vmatpush1.msra.mxu0 %v1325
  %1331 = vmatprep.subr.mxu0 0.0
  %1332 = vmatpush1.msra.mxu0 0.0
  %1333 = vmatprep.subr.mxu0 0.0
  %1334 = vmatpush1.msra.mxu0 0.0
  %1335 = vmatprep.subr.mxu0 0.0
  %1336 = vmatpush1.msra.mxu0 0.0
  %1337 = vmatprep.subr.mxu0 0.0
  %1338 = vmatpush1.msra.mxu0 0.0
  %1339 = vmatprep.subr.mxu0 0.0
  %1340 = vmatpush1.msra.mxu0 0.0
  %1341 = vmatprep.subr.mxu0 0.0
  %1342 = vmatpush1.msra.mxu0 0.0
  %1343 = vmatprep.subr.mxu0 0.0
  %1344 = vmatpush1.msra.mxu0 0.0
  %1345 = vmatprep.subr.mxu0 0.0
  %1346 = vmatpush1.msra.mxu0 0.0
  %1347 = vmatprep.subr.mxu0 0.0
  %1348 = vmatpush1.msra.mxu0 0.0
  %1349 = vmatprep.subr.mxu0 0.0
  %1350 = vmatpush1.msra.mxu0 0.0
  %1351 = vmatprep.subr.mxu0 0.0
  %1352 = vmatpush1.msra.mxu0 0.0
  %1353 = vmatprep.subr.mxu0 0.0
  %1354 = vmatpush1.msra.mxu0 0.0
  %1355 = vmatprep.subr.mxu0 0.0
  %1356 = vmatpush1.msra.mxu0 0.0
  %1357 = vmatprep.subr.mxu0 0.0
  %1358 = vmatpush1.msra.mxu0 0.0
  %1359 = vmatprep.subr.mxu0 0.0
  %1360 = vmatpush1.msra.mxu0 0.0
  %1361 = vmatprep.subr.mxu0 0.0
  %1362 = vmatpush1.msra.mxu0 0.0
  %1363 = vmatprep.subr.mxu0 0.0
  %1364 = vmatpush1.msra.mxu0 0.0
  %1365 = vmatprep.subr.mxu0 0.0
  %1366 = vmatpush1.msra.mxu0 0.0
  %1367 = vmatprep.subr.mxu0 0.0
  %1368 = vmatpush1.msra.mxu0 0.0
  %1369 = vmatprep.subr.mxu0 0.0
  %1370 = vmatpush1.msra.mxu0 0.0
  %1371 = vmatprep.subr.mxu0 0.0
  %1372 = vmatpush1.msra.mxu0 0.0
  %1373 = vmatprep.subr.mxu0 0.0
  %1374 = vmatpush1.msra.mxu0 0.0
  %1375 = vmatprep.subr.mxu0 0.0
  %1376 = vmatpush1.msra.mxu0 0.0
  %1377 = vmatprep.subr.mxu0 0.0
  %1378 = vmatpush1.msra.mxu0 0.0
  %1379 = vmatprep.subr.mxu0 0.0
  %1380 = vmatpush1.msra.mxu0 0.0
  %1381 = vmatprep.subr.mxu0 0.0
  %1382 = vmatpush1.msra.mxu0 0.0
  %1383 = vmatprep.subr.mxu0 0.0
  %1384 = vmatpush1.msra.mxu0 0.0
  %1385 = vmatprep.subr.mxu0 0.0
  %1386 = vmatpush1.msra.mxu0 0.0
  %1387 = vmatprep.subr.mxu0 0.0
  %1388 = vmatpush1.msra.mxu0 0.0
  %1389 = vmatprep.subr.mxu0 0.0
  %1390 = vmatpush1.msra.mxu0 0.0
  %1391 = vmatprep.subr.mxu0 0.0
  %1392 = vmatpush1.msra.mxu0 0.0
  %1393 = vmatprep.mubr.f32.mxu0 0.0
  %1394 = vmatmul.mubr.f32.gmra.mrb[0].mxu0 %v1327
  %v1395 = vpop.f32.mrb[0].mxu0
  %v1396 = vadd.f32 0.0, %v1395
  %v1397 = vpop.f32.mrb[0].mxu0
  %1398 = vdwg.mxu0
  %v1401 = vunpack.c.l.s4 1966171168
  %v1402 = vunpack.c.0.s8 %v1401
  %v1403 = vlaneseq
  %v1404 = vshrl.u32 %v1403, 7
  %v1405 = vsub.s32 %v1402, %v1404
  %v1406 = vrot.slane %v1396, %v1405
  %v1407 = vcombine.high %v1406, %v1406
  %v1409 = vunpack.c.l.s4 1966171168
  %v1410 = vunpack.c.0.s8 %v1409
  %v1411 = vlaneseq
  %v1412 = vshrl.u32 %v1411, 7
  %v1413 = vsub.s32 %v1410, %v1412
  %v1414 = vrot.slane %v1406, %v1413
  %v1416 = vunpack.c.l.s4 1966171168
  %v1417 = vunpack.c.0.s8 %v1416
  %v1418 = vlaneseq
  %v1419 = vshrl.u32 %v1418, 7
  %v1420 = vsub.s32 %v1417, %v1419
  %v1421 = vrot.slane %v1407, %v1420
  %v1422 = vlaneseq
  %v1423 = vshrl.u32 %v1422, 7
  %v1424 = vsub.s32 0, %v1423
  %v1425 = vrot.slane %v1414, %v1424
  %v1426 = vlaneseq
  %v1427 = vshrl.u32 %v1426, 7
  %v1428 = vsub.s32 0, %v1427
  %v1429 = vrot.slane %v1421, %v1428
  %v1432 = vsub.f32 %v1174, %v1425
  %v1433 = vsub.f32 %v1175, %v1425
  %v1434 = vsub.f32 %v1176, %v1429
  %v1435 = vsub.f32 %v1177, %v1429
  %1436 = vrot.lane.b32.xlu0 %v1425, 64
  %v1437 = vpop.permute.xlu0 %1436
  %1438 = vrot.lane.b32.xlu0 %v1429, 64
  %v1439 = vpop.permute.xlu0 %1438
  %v1442 = vmul.f32 %v1432, %v1437
  %v1443 = vmul.f32 %v1433, %v1437
  %v1444 = vmul.f32 %v1434, %v1439
  %v1445 = vmul.f32 %v1435, %v1439
  %vm1446 = vcmp.ge.f32.partialorder %v1442, 0.0
  %vm1447 = vcmp.ge.f32.partialorder %v1443, 0.0
  %vm1448 = vcmp.ge.f32.partialorder %v1444, 0.0
  %vm1449 = vcmp.ge.f32.partialorder %v1445, 0.0
  %v1450 = vmul.f32 %v1442, 0.2
  %v1451 = vmul.f32 %v1443, 0.2
  %v1452 = vmul.f32 %v1444, 0.2
  %v1453 = vmul.f32 %v1445, 0.2
  %v1454 = vsel %vm1446, %v1442, %v1450
  %v1455 = vsel %vm1447, %v1443, %v1451
  %v1456 = vsel %vm1448, %v1444, %v1452
  %v1457 = vsel %vm1449, %v1445, %v1453
  %v1458 = vld [vmem:[%s0] sm:$0xff]
  %v1459 = vld [vmem:[%s0 + $0x8] sm:$0xff]
  %v1460 = vld [vmem:[%s0 + $0x10] sm:$0xff]
  %v1461 = vld [vmem:[%s0 + $0x18] sm:$0xff]
  %v1462 = vadd.f32 %v1458, %v1454
  %v1463 = vadd.f32 %v1459, %v1455
  %v1464 = vadd.f32 %v1460, %v1456
  %v1465 = vadd.f32 %v1461, %v1457
  %1466 = vst.msk [vmem:[%s7] sm:$0xff] %vm154, %v1462
  %1467 = vst.msk [vmem:[%s7 + $0x8] sm:$0xff] %vm154, %v1463
  %1468 = vst.msk [vmem:[%s7 + $0x10] sm:$0xff] %vm154, %v1464
  %1469 = vst.msk [vmem:[%s7 + $0x18] sm:$0xff] %vm154, %v1465
  // Predicated region
  $region30: #{feed_forward_pallas.1} parent=0 // pred_check
    _
  $region31: #{feed_forward_pallas.1} parent=0 // pred_check_branch
    %1471 = sbr.rel (0) target = $region33
  $region32: #{feed_forward_pallas.1} parent=0 // pred_region
    _
  $region33: #{feed_forward_pallas.1} parent=0 // pred_fallthru
    _
  // Predicated region
  $region34: #{feed_forward_pallas.1} parent=0 // pred_check
    _
  $region35: #{feed_forward_pallas.1} parent=0 // pred_check_branch
    %1473 = sbr.rel (0) target = $region37
  $region36: #{feed_forward_pallas.1} parent=0 // pred_region
    _
  $region37: #{feed_forward_pallas.1} parent=0 // pred_fallthru
    _

</llo_original>
